<compile_context>
chip_gen: v6e
topology: v6e:2x2x1
jax: 0.10.0
libtpu: 0.0.40
codegen_flags: <defaults>
</compile_context>

<pallas_src>
import functools

import jax
import jax.numpy as jnp
from jax.experimental import pallas as pl
from jax.experimental.pallas import tpu as pltpu


# --------------------------- fused model kernel -------------------------------
def _lstm_model_kernel(x_ref, *rest, B, S, H, num_layers):
    """rest = (w_ih_0, w_hh_0, b_0, ..., w_ih_{L-1}, w_hh_{L-1}, b_{L-1},
               proj_w, proj_b, out_ref)

    Packed layout (see pack_params):
      * gate column order is PyTorch's [i, f, g, o]; i/f/o columns pre-scaled
        by 0.5 so sigmoid(a) == tanh(col)*0.5 + 0.5.
      * w_hh / w_ih (layers >= 1) / proj_w are zero-embedded into rows [H, 2H)
        of a (4H, .) matrix; the h and c slabs carry their valid data in lanes
        [H, 2H) ("block 1") with bounded finite junk elsewhere.
    """
    *layer_refs, pw_ref, pb_ref, out_ref = rest
    G = 4 * H

    # Hoisted per-lane activation constants: i/f/o lanes -> 0.5*tanh + 0.5
    # (sigmoid of the pre-scaled gate), g lanes -> plain tanh.
    lane = jax.lax.broadcasted_iota(jnp.int32, (B, G), 1)
    is_g = jnp.logical_and(lane >= 2 * H, lane < 3 * H)
    scale = jnp.where(is_g, 1.0, 0.5)
    offset = jnp.where(is_g, 0.0, 0.5)

    seq = x_ref[...]                            # (S*B, Din), rows ordered t*B + b
    h = None
    for l in range(num_layers):
        w_ih = layer_refs[3 * l][...]           # (Din, 4H) or (4H, 4H) zero-embedded
        w_hh = layer_refs[3 * l + 1][...]       # (4H, 4H), rows [H,2H) = W_hh
        bias = layer_refs[3 * l + 2][...]       # (1, 4H)

        # Hoisted input projection: one matmul covers all S steps of this layer.
        xproj = jnp.dot(seq, w_ih, preferred_element_type=jnp.float32) + bias

        h = jnp.zeros((B, G), jnp.float32)      # valid h in lanes [H, 2H)
        c = jnp.zeros((B, G), jnp.float32)      # valid c in lanes [H, 2H)
        outs = []
        for t in range(S):                      # statically unrolled recurrence
            gates = xproj[t * B:(t + 1) * B, :] + jnp.dot(
                h, w_hh, preferred_element_type=jnp.float32)     # (B, 4H)
            act = jnp.tanh(gates) * scale + offset  # blocks [σ(i), σ(f), tanh(g), σ(o)]
            r2 = pltpu.roll(act, 2 * H, axis=1)     # blocks [g', f'... -> g,o,i,f]
            ig = pltpu.roll(act * r2, H, axis=1)    # i*g lands in blocks 1 and 3
            c = ig + act * c                        # block 1: i*g + f*c
            h = r2 * jnp.tanh(c)                    # block 1: o*tanh(c)
            outs.append(h)
        if l + 1 < num_layers:
            seq = jnp.concatenate(outs, axis=0)     # (S*B, 4H) next-layer input

    # hidden[-1] of the last layer -> Linear.  proj_w rows [H,2H) are the only
    # nonzero ones, so junk lanes of h are ignored.  Only HBM write of the kernel.
    out_ref[...] = (jnp.dot(h, pw_ref[...], preferred_element_type=jnp.float32)
                    + pb_ref[...]).astype(out_ref.dtype)


# ------------------------------- forward --------------------------------------
@jax.jit
def lstm_model_forward(x, packed):
    """x: (B, S, input_size) batch_first, like PyTorch. Returns (B, projection_size)."""
    x = x.astype(jnp.float32)
    B, S, Din = x.shape
    G = packed["lstm"][0][1].shape[0]          # w_hh_big : (4H, 4H)
    H = G // 4
    P = packed["proj_w"].shape[1]
    num_layers = len(packed["lstm"])

    # Wrapper-side layout plumbing (free): time-major rows, row index = t*B + b.
    x_rows = jnp.transpose(x, (1, 0, 2)).reshape(S * B, Din)

    flat = []
    for w_ih, w_hh, b in packed["lstm"]:
        flat.extend((w_ih, w_hh, b))
    operands = (x_rows, *flat, packed["proj_w"], packed["proj_b"])

    # Advisory cost estimate for XLA's scheduler around the custom call.
    flops = 2 * B * G * P
    trans = 0
    d_in = Din
    for _ in range(num_layers):
        flops += 2 * S * B * d_in * G                   # hoisted input projection
        flops += S * (2 * B * G * G + 8 * B * G)        # recurrence
        trans += S * 2 * B * G                          # two tanh passes / step
        d_in = G
    bytes_accessed = 4 * (sum(int(op.size) for op in operands) + B * P)

    return pl.pallas_call(
        functools.partial(_lstm_model_kernel, B=B, S=S, H=H, num_layers=num_layers),
        out_shape=jax.ShapeDtypeStruct((B, P), jnp.float32),
        in_specs=[pl.BlockSpec(memory_space=pltpu.MemorySpace.VMEM)] * len(operands),
        out_specs=pl.BlockSpec(memory_space=pltpu.MemorySpace.VMEM),
        cost_estimate=pl.CostEstimate(flops=flops, transcendentals=trans,
                                      bytes_accessed=bytes_accessed),
    )(*operands)


# ------------------------------- params ---------------------------------------
def init_params(key, input_size, hidden_size, num_layers, projection_size):
    """Parameters in PyTorch nn.LSTM / nn.Linear layout (gate row order i,f,g,o)."""
    params = {"lstm": []}
    bound = 1.0 / (hidden_size ** 0.5)
    d_in = input_size
    for _ in range(num_layers):
        k1, k2, k3, k4, key = jax.random.split(key, 5)
        w_ih = jax.random.uniform(k1, (4 * hidden_size, d_in), jnp.float32, -bound, bound)
        w_hh = jax.random.uniform(k2, (4 * hidden_size, hidden_size), jnp.float32, -bound, bound)
        b_ih = jax.random.uniform(k3, (4 * hidden_size,), jnp.float32, -bound, bound)
        b_hh = jax.random.uniform(k4, (4 * hidden_size,), jnp.float32, -bound, bound)
        params["lstm"].append((w_ih, w_hh, b_ih, b_hh))
        d_in = hidden_size
    k1, k2, key = jax.random.split(key, 3)
    params["proj_w"] = jax.random.uniform(
        k1, (projection_size, hidden_size), jnp.float32, -bound, bound)
    params["proj_b"] = jax.random.uniform(
        k2, (projection_size,), jnp.float32, -bound, bound)
    return params


def pack_params(params):
    """PyTorch-layout params -> kernel operands.

    Transposes weights, pre-scales the i/f/o gate columns (and bias) by 0.5
    (so the in-kernel activation is a single tanh pass), and zero-embeds the
    recurrent / deep-layer / projection weights into rows [H, 2H) of a (4H,.)
    matrix so the (B, 4H) h-slab feeds the MXU without any lane extraction.
    """
    H = params["lstm"][0][1].shape[1]          # w_hh : (4H, H)
    G = 4 * H
    col = jnp.arange(G)
    col_scale = jnp.where((col >= 2 * H) & (col < 3 * H), 1.0, 0.5)[None, :]

    packed = {"lstm": []}
    for li, (w_ih, w_hh, b_ih, b_hh) in enumerate(params["lstm"]):
        w_ih_t = w_ih.T.astype(jnp.float32) * col_scale          # (Din_l, 4H)
        w_hh_t = w_hh.T.astype(jnp.float32) * col_scale          # (H,     4H)
        bias = (b_ih + b_hh)[None, :].astype(jnp.float32) * col_scale
        w_hh_big = jnp.zeros((G, G), jnp.float32).at[H:2 * H, :].set(w_hh_t)
        if li == 0:
            w_ih_k = w_ih_t                                      # dense x input
        else:
            w_ih_k = jnp.zeros((G, G), jnp.float32).at[H:2 * H, :].set(w_ih_t)
        packed["lstm"].append((w_ih_k, w_hh_big, bias))

    pw = params["proj_w"].astype(jnp.float32)                    # (P, H)
    packed["proj_w"] = jnp.zeros((G, pw.shape[0]), jnp.float32).at[H:2 * H, :].set(pw.T)
    packed["proj_b"] = params["proj_b"].astype(jnp.float32)[None, :]
    return packed


# --------------------------- pure-JAX reference -------------------------------
def lstm_model_reference(x, params):
    h_seq = jnp.transpose(x, (1, 0, 2)).astype(jnp.float32)      # (S, B, Din)
    B = h_seq.shape[1]
    for w_ih, w_hh, b_ih, b_hh in params["lstm"]:
        H = w_hh.shape[1]
        b = b_ih + b_hh

        def step(carry, x_t, w_ih=w_ih, w_hh=w_hh, b=b, H=H):
            h, c = carry
            gates = x_t @ w_ih.T + h @ w_hh.T + b
            i = jax.nn.sigmoid(gates[:, 0 * H:1 * H])
            f = jax.nn.sigmoid(gates[:, 1 * H:2 * H])
            g = jnp.tanh(gates[:, 2 * H:3 * H])
            o = jax.nn.sigmoid(gates[:, 3 * H:4 * H])
            c = f * c + i * g
            h = o * jnp.tanh(c)
            return (h, c), h

        init = (jnp.zeros((B, H), jnp.float32), jnp.zeros((B, H), jnp.float32))
        _, h_seq = jax.lax.scan(step, init, h_seq)
    return h_seq[-1] @ params["proj_w"].T + params["proj_b"]


if __name__ == "__main__":
    # Small shapes consistent with LSTMModel(input_size, hidden_size, num_layers)
    batch, seq = 2, 8
    input_size, hidden_size, num_layers, projection_size = 16, 32, 2, 128

    key = jax.random.PRNGKey(0)
    kx, kp = jax.random.split(key)
    x = jax.random.normal(kx, (batch, seq, input_size), jnp.float32)
    params = init_params(kp, input_size, hidden_size, num_layers, projection_size)
    packed = pack_params(params)

    out = lstm_model_forward(x, packed)
    out = jax.block_until_ready(out)

    ref = lstm_model_reference(x, params)
    assert out.shape == (batch, projection_size), out.shape
    max_err = float(jnp.max(jnp.abs(out - ref)))
    assert jnp.allclose(out, ref, rtol=1e-4, atol=1e-4), max_err

    print("KERNEL_OK")
</pallas_src>

<mosaic_0001>
module attributes {stable_mosaic.version = 11 : i64} {
  func.func @_lstm_model_kernel(%arg0: memref<16x16xf32, #tpu.memory_space<vmem>>, %arg1: memref<16x128xf32, #tpu.memory_space<vmem>>, %arg2: memref<128x128xf32, #tpu.memory_space<vmem>>, %arg3: memref<1x128xf32, #tpu.memory_space<vmem>>, %arg4: memref<128x128xf32, #tpu.memory_space<vmem>>, %arg5: memref<128x128xf32, #tpu.memory_space<vmem>>, %arg6: memref<1x128xf32, #tpu.memory_space<vmem>>, %arg7: memref<128x128xf32, #tpu.memory_space<vmem>>, %arg8: memref<1x128xf32, #tpu.memory_space<vmem>>, %arg9: memref<2x128xf32, #tpu.memory_space<vmem>>) attributes {dimension_semantics = [], scalar_prefetch = 0 : i64, scratch_operands = 0 : i64, tpu.core_type = #tpu.core_type<tc>} {
    %0 = tpu.iota {dimensions = array<i32: 1>} : vector<2x128xi32>
    %c64_i32 = arith.constant 64 : i32
    %1 = vector.broadcast %c64_i32 : i32 to vector<2x128xi32>
    %2 = arith.cmpi sge, %0, %1 : vector<2x128xi32>
    %c96_i32 = arith.constant 96 : i32
    %3 = vector.broadcast %c96_i32 : i32 to vector<2x128xi32>
    %4 = arith.cmpi slt, %0, %3 : vector<2x128xi32>
    %5 = arith.andi %2, %4 : vector<2x128xi1>
    %cst = arith.constant 1.000000e+00 : f32
    %cst_0 = arith.constant 5.000000e-01 : f32
    %6 = vector.broadcast %cst : f32 to vector<2x128xf32>
    %7 = vector.broadcast %cst_0 : f32 to vector<2x128xf32>
    %8 = arith.select %5, %6, %7 : vector<2x128xi1>, vector<2x128xf32>
    %cst_1 = arith.constant 0.000000e+00 : f32
    %cst_2 = arith.constant 5.000000e-01 : f32
    %9 = vector.broadcast %cst_1 : f32 to vector<2x128xf32>
    %10 = vector.broadcast %cst_2 : f32 to vector<2x128xf32>
    %11 = arith.select %5, %9, %10 : vector<2x128xi1>, vector<2x128xf32>
    %c0 = arith.constant 0 : index
    %c0_3 = arith.constant 0 : index
    %12 = vector.load %arg0[%c0, %c0_3] : memref<16x16xf32, #tpu.memory_space<vmem>>, vector<16x16xf32>
    %c0_4 = arith.constant 0 : index
    %c0_5 = arith.constant 0 : index
    %13 = vector.load %arg1[%c0_4, %c0_5] : memref<16x128xf32, #tpu.memory_space<vmem>>, vector<16x128xf32>
    %c0_6 = arith.constant 0 : index
    %c0_7 = arith.constant 0 : index
    %14 = vector.load %arg2[%c0_6, %c0_7] : memref<128x128xf32, #tpu.memory_space<vmem>>, vector<128x128xf32>
    %c0_8 = arith.constant 0 : index
    %c0_9 = arith.constant 0 : index
    %15 = vector.load %arg3[%c0_8, %c0_9] : memref<1x128xf32, #tpu.memory_space<vmem>>, vector<1x128xf32>
    %cst_10 = arith.constant dense<0.000000e+00> : vector<16x128xf32>
    %16 = tpu.matmul %12, %13, %cst_10 {dimension_numbers = #tpu.dot_dimension_numbers<[1], [0], [0], [1], [0, 0, 1, 1], [], []>} : vector<16x16xf32>, vector<16x128xf32>, vector<16x128xf32> -> vector<16x128xf32>
    %17 = vector.broadcast %15 : vector<1x128xf32> to vector<16x128xf32>
    %18 = arith.addf %16, %17 : vector<16x128xf32>
    %cst_11 = arith.constant 0.000000e+00 : f32
    %19 = vector.broadcast %cst_11 : f32 to vector<2x128xf32>
    %cst_12 = arith.constant 0.000000e+00 : f32
    %20 = vector.broadcast %cst_12 : f32 to vector<2x128xf32>
    %21 = vector.extract_strided_slice %18 {offsets = [0, 0], sizes = [2, 128], strides = [1, 1]} : vector<16x128xf32> to vector<2x128xf32>
    %cst_13 = arith.constant dense<0.000000e+00> : vector<2x128xf32>
    %22 = tpu.matmul %19, %14, %cst_13 {dimension_numbers = #tpu.dot_dimension_numbers<[1], [0], [0], [1], [0, 0, 1, 1], [], []>} : vector<2x128xf32>, vector<128x128xf32>, vector<2x128xf32> -> vector<2x128xf32>
    %23 = arith.addf %21, %22 : vector<2x128xf32>
    %24 = math.tanh %23 : vector<2x128xf32>
    %25 = arith.mulf %24, %8 : vector<2x128xf32>
    %26 = arith.addf %25, %11 : vector<2x128xf32>
    %c64_i32_14 = arith.constant 64 : i32
    %27 = tpu.dynamic_rotate %26 by %c64_i32_14 dim 1 : vector<2x128xf32>, i32 -> vector<2x128xf32>
    %28 = arith.mulf %26, %27 : vector<2x128xf32>
    %c32_i32 = arith.constant 32 : i32
    %29 = tpu.dynamic_rotate %28 by %c32_i32 dim 1 : vector<2x128xf32>, i32 -> vector<2x128xf32>
    %30 = arith.mulf %26, %20 : vector<2x128xf32>
    %31 = arith.addf %29, %30 : vector<2x128xf32>
    %32 = math.tanh %31 : vector<2x128xf32>
    %33 = arith.mulf %27, %32 : vector<2x128xf32>
    %34 = vector.extract_strided_slice %18 {offsets = [2, 0], sizes = [2, 128], strides = [1, 1]} : vector<16x128xf32> to vector<2x128xf32>
    %cst_15 = arith.constant dense<0.000000e+00> : vector<2x128xf32>
    %35 = tpu.matmul %33, %14, %cst_15 {dimension_numbers = #tpu.dot_dimension_numbers<[1], [0], [0], [1], [0, 0, 1, 1], [], []>} : vector<2x128xf32>, vector<128x128xf32>, vector<2x128xf32> -> vector<2x128xf32>
    %36 = arith.addf %34, %35 : vector<2x128xf32>
    %37 = math.tanh %36 : vector<2x128xf32>
    %38 = arith.mulf %37, %8 : vector<2x128xf32>
    %39 = arith.addf %38, %11 : vector<2x128xf32>
    %c64_i32_16 = arith.constant 64 : i32
    %40 = tpu.dynamic_rotate %39 by %c64_i32_16 dim 1 : vector<2x128xf32>, i32 -> vector<2x128xf32>
    %41 = arith.mulf %39, %40 : vector<2x128xf32>
    %c32_i32_17 = arith.constant 32 : i32
    %42 = tpu.dynamic_rotate %41 by %c32_i32_17 dim 1 : vector<2x128xf32>, i32 -> vector<2x128xf32>
    %43 = arith.mulf %39, %31 : vector<2x128xf32>
    %44 = arith.addf %42, %43 : vector<2x128xf32>
    %45 = math.tanh %44 : vector<2x128xf32>
    %46 = arith.mulf %40, %45 : vector<2x128xf32>
    %47 = vector.extract_strided_slice %18 {offsets = [4, 0], sizes = [2, 128], strides = [1, 1]} : vector<16x128xf32> to vector<2x128xf32>
    %cst_18 = arith.constant dense<0.000000e+00> : vector<2x128xf32>
    %48 = tpu.matmul %46, %14, %cst_18 {dimension_numbers = #tpu.dot_dimension_numbers<[1], [0], [0], [1], [0, 0, 1, 1], [], []>} : vector<2x128xf32>, vector<128x128xf32>, vector<2x128xf32> -> vector<2x128xf32>
    %49 = arith.addf %47, %48 : vector<2x128xf32>
    %50 = math.tanh %49 : vector<2x128xf32>
    %51 = arith.mulf %50, %8 : vector<2x128xf32>
    %52 = arith.addf %51, %11 : vector<2x128xf32>
    %c64_i32_19 = arith.constant 64 : i32
    %53 = tpu.dynamic_rotate %52 by %c64_i32_19 dim 1 : vector<2x128xf32>, i32 -> vector<2x128xf32>
    %54 = arith.mulf %52, %53 : vector<2x128xf32>
    %c32_i32_20 = arith.constant 32 : i32
    %55 = tpu.dynamic_rotate %54 by %c32_i32_20 dim 1 : vector<2x128xf32>, i32 -> vector<2x128xf32>
    %56 = arith.mulf %52, %44 : vector<2x128xf32>
    %57 = arith.addf %55, %56 : vector<2x128xf32>
    %58 = math.tanh %57 : vector<2x128xf32>
    %59 = arith.mulf %53, %58 : vector<2x128xf32>
    %60 = vector.extract_strided_slice %18 {offsets = [6, 0], sizes = [2, 128], strides = [1, 1]} : vector<16x128xf32> to vector<2x128xf32>
    %cst_21 = arith.constant dense<0.000000e+00> : vector<2x128xf32>
    %61 = tpu.matmul %59, %14, %cst_21 {dimension_numbers = #tpu.dot_dimension_numbers<[1], [0], [0], [1], [0, 0, 1, 1], [], []>} : vector<2x128xf32>, vector<128x128xf32>, vector<2x128xf32> -> vector<2x128xf32>
    %62 = arith.addf %60, %61 : vector<2x128xf32>
    %63 = math.tanh %62 : vector<2x128xf32>
    %64 = arith.mulf %63, %8 : vector<2x128xf32>
    %65 = arith.addf %64, %11 : vector<2x128xf32>
    %c64_i32_22 = arith.constant 64 : i32
    %66 = tpu.dynamic_rotate %65 by %c64_i32_22 dim 1 : vector<2x128xf32>, i32 -> vector<2x128xf32>
    %67 = arith.mulf %65, %66 : vector<2x128xf32>
    %c32_i32_23 = arith.constant 32 : i32
    %68 = tpu.dynamic_rotate %67 by %c32_i32_23 dim 1 : vector<2x128xf32>, i32 -> vector<2x128xf32>
    %69 = arith.mulf %65, %57 : vector<2x128xf32>
    %70 = arith.addf %68, %69 : vector<2x128xf32>
    %71 = math.tanh %70 : vector<2x128xf32>
    %72 = arith.mulf %66, %71 : vector<2x128xf32>
    %73 = vector.extract_strided_slice %18 {offsets = [8, 0], sizes = [2, 128], strides = [1, 1]} : vector<16x128xf32> to vector<2x128xf32>
    %cst_24 = arith.constant dense<0.000000e+00> : vector<2x128xf32>
    %74 = tpu.matmul %72, %14, %cst_24 {dimension_numbers = #tpu.dot_dimension_numbers<[1], [0], [0], [1], [0, 0, 1, 1], [], []>} : vector<2x128xf32>, vector<128x128xf32>, vector<2x128xf32> -> vector<2x128xf32>
    %75 = arith.addf %73, %74 : vector<2x128xf32>
    %76 = math.tanh %75 : vector<2x128xf32>
    %77 = arith.mulf %76, %8 : vector<2x128xf32>
    %78 = arith.addf %77, %11 : vector<2x128xf32>
    %c64_i32_25 = arith.constant 64 : i32
    %79 = tpu.dynamic_rotate %78 by %c64_i32_25 dim 1 : vector<2x128xf32>, i32 -> vector<2x128xf32>
    %80 = arith.mulf %78, %79 : vector<2x128xf32>
    %c32_i32_26 = arith.constant 32 : i32
    %81 = tpu.dynamic_rotate %80 by %c32_i32_26 dim 1 : vector<2x128xf32>, i32 -> vector<2x128xf32>
    %82 = arith.mulf %78, %70 : vector<2x128xf32>
    %83 = arith.addf %81, %82 : vector<2x128xf32>
    %84 = math.tanh %83 : vector<2x128xf32>
    %85 = arith.mulf %79, %84 : vector<2x128xf32>
    %86 = vector.extract_strided_slice %18 {offsets = [10, 0], sizes = [2, 128], strides = [1, 1]} : vector<16x128xf32> to vector<2x128xf32>
    %cst_27 = arith.constant dense<0.000000e+00> : vector<2x128xf32>
    %87 = tpu.matmul %85, %14, %cst_27 {dimension_numbers = #tpu.dot_dimension_numbers<[1], [0], [0], [1], [0, 0, 1, 1], [], []>} : vector<2x128xf32>, vector<128x128xf32>, vector<2x128xf32> -> vector<2x128xf32>
    %88 = arith.addf %86, %87 : vector<2x128xf32>
    %89 = math.tanh %88 : vector<2x128xf32>
    %90 = arith.mulf %89, %8 : vector<2x128xf32>
    %91 = arith.addf %90, %11 : vector<2x128xf32>
    %c64_i32_28 = arith.constant 64 : i32
    %92 = tpu.dynamic_rotate %91 by %c64_i32_28 dim 1 : vector<2x128xf32>, i32 -> vector<2x128xf32>
    %93 = arith.mulf %91, %92 : vector<2x128xf32>
    %c32_i32_29 = arith.constant 32 : i32
    %94 = tpu.dynamic_rotate %93 by %c32_i32_29 dim 1 : vector<2x128xf32>, i32 -> vector<2x128xf32>
    %95 = arith.mulf %91, %83 : vector<2x128xf32>
    %96 = arith.addf %94, %95 : vector<2x128xf32>
    %97 = math.tanh %96 : vector<2x128xf32>
    %98 = arith.mulf %92, %97 : vector<2x128xf32>
    %99 = vector.extract_strided_slice %18 {offsets = [12, 0], sizes = [2, 128], strides = [1, 1]} : vector<16x128xf32> to vector<2x128xf32>
    %cst_30 = arith.constant dense<0.000000e+00> : vector<2x128xf32>
    %100 = tpu.matmul %98, %14, %cst_30 {dimension_numbers = #tpu.dot_dimension_numbers<[1], [0], [0], [1], [0, 0, 1, 1], [], []>} : vector<2x128xf32>, vector<128x128xf32>, vector<2x128xf32> -> vector<2x128xf32>
    %101 = arith.addf %99, %100 : vector<2x128xf32>
    %102 = math.tanh %101 : vector<2x128xf32>
    %103 = arith.mulf %102, %8 : vector<2x128xf32>
    %104 = arith.addf %103, %11 : vector<2x128xf32>
    %c64_i32_31 = arith.constant 64 : i32
    %105 = tpu.dynamic_rotate %104 by %c64_i32_31 dim 1 : vector<2x128xf32>, i32 -> vector<2x128xf32>
    %106 = arith.mulf %104, %105 : vector<2x128xf32>
    %c32_i32_32 = arith.constant 32 : i32
    %107 = tpu.dynamic_rotate %106 by %c32_i32_32 dim 1 : vector<2x128xf32>, i32 -> vector<2x128xf32>
    %108 = arith.mulf %104, %96 : vector<2x128xf32>
    %109 = arith.addf %107, %108 : vector<2x128xf32>
    %110 = math.tanh %109 : vector<2x128xf32>
    %111 = arith.mulf %105, %110 : vector<2x128xf32>
    %112 = vector.extract_strided_slice %18 {offsets = [14, 0], sizes = [2, 128], strides = [1, 1]} : vector<16x128xf32> to vector<2x128xf32>
    %cst_33 = arith.constant dense<0.000000e+00> : vector<2x128xf32>
    %113 = tpu.matmul %111, %14, %cst_33 {dimension_numbers = #tpu.dot_dimension_numbers<[1], [0], [0], [1], [0, 0, 1, 1], [], []>} : vector<2x128xf32>, vector<128x128xf32>, vector<2x128xf32> -> vector<2x128xf32>
    %114 = arith.addf %112, %113 : vector<2x128xf32>
    %115 = math.tanh %114 : vector<2x128xf32>
    %116 = arith.mulf %115, %8 : vector<2x128xf32>
    %117 = arith.addf %116, %11 : vector<2x128xf32>
    %c64_i32_34 = arith.constant 64 : i32
    %118 = tpu.dynamic_rotate %117 by %c64_i32_34 dim 1 : vector<2x128xf32>, i32 -> vector<2x128xf32>
    %119 = arith.mulf %117, %118 : vector<2x128xf32>
    %c32_i32_35 = arith.constant 32 : i32
    %120 = tpu.dynamic_rotate %119 by %c32_i32_35 dim 1 : vector<2x128xf32>, i32 -> vector<2x128xf32>
    %121 = arith.mulf %117, %109 : vector<2x128xf32>
    %122 = arith.addf %120, %121 : vector<2x128xf32>
    %123 = math.tanh %122 : vector<2x128xf32>
    %124 = arith.mulf %118, %123 : vector<2x128xf32>
    %125 = tpu.concatenate %33, %46, %59, %72, %85, %98, %111, %124 in 0 : vector<2x128xf32>, vector<2x128xf32>, vector<2x128xf32>, vector<2x128xf32>, vector<2x128xf32>, vector<2x128xf32>, vector<2x128xf32>, vector<2x128xf32> -> vector<16x128xf32>
    %c0_36 = arith.constant 0 : index
    %c0_37 = arith.constant 0 : index
    %126 = vector.load %arg4[%c0_36, %c0_37] : memref<128x128xf32, #tpu.memory_space<vmem>>, vector<128x128xf32>
    %c0_38 = arith.constant 0 : index
    %c0_39 = arith.constant 0 : index
    %127 = vector.load %arg5[%c0_38, %c0_39] : memref<128x128xf32, #tpu.memory_space<vmem>>, vector<128x128xf32>
    %c0_40 = arith.constant 0 : index
    %c0_41 = arith.constant 0 : index
    %128 = vector.load %arg6[%c0_40, %c0_41] : memref<1x128xf32, #tpu.memory_space<vmem>>, vector<1x128xf32>
    %cst_42 = arith.constant dense<0.000000e+00> : vector<16x128xf32>
    %129 = tpu.matmul %125, %126, %cst_42 {dimension_numbers = #tpu.dot_dimension_numbers<[1], [0], [0], [1], [0, 0, 1, 1], [], []>} : vector<16x128xf32>, vector<128x128xf32>, vector<16x128xf32> -> vector<16x128xf32>
    %130 = vector.broadcast %128 : vector<1x128xf32> to vector<16x128xf32>
    %131 = arith.addf %129, %130 : vector<16x128xf32>
    %cst_43 = arith.constant 0.000000e+00 : f32
    %132 = vector.broadcast %cst_43 : f32 to vector<2x128xf32>
    %cst_44 = arith.constant 0.000000e+00 : f32
    %133 = vector.broadcast %cst_44 : f32 to vector<2x128xf32>
    %134 = vector.extract_strided_slice %131 {offsets = [0, 0], sizes = [2, 128], strides = [1, 1]} : vector<16x128xf32> to vector<2x128xf32>
    %cst_45 = arith.constant dense<0.000000e+00> : vector<2x128xf32>
    %135 = tpu.matmul %132, %127, %cst_45 {dimension_numbers = #tpu.dot_dimension_numbers<[1], [0], [0], [1], [0, 0, 1, 1], [], []>} : vector<2x128xf32>, vector<128x128xf32>, vector<2x128xf32> -> vector<2x128xf32>
    %136 = arith.addf %134, %135 : vector<2x128xf32>
    %137 = math.tanh %136 : vector<2x128xf32>
    %138 = arith.mulf %137, %8 : vector<2x128xf32>
    %139 = arith.addf %138, %11 : vector<2x128xf32>
    %c64_i32_46 = arith.constant 64 : i32
    %140 = tpu.dynamic_rotate %139 by %c64_i32_46 dim 1 : vector<2x128xf32>, i32 -> vector<2x128xf32>
    %141 = arith.mulf %139, %140 : vector<2x128xf32>
    %c32_i32_47 = arith.constant 32 : i32
    %142 = tpu.dynamic_rotate %141 by %c32_i32_47 dim 1 : vector<2x128xf32>, i32 -> vector<2x128xf32>
    %143 = arith.mulf %139, %133 : vector<2x128xf32>
    %144 = arith.addf %142, %143 : vector<2x128xf32>
    %145 = math.tanh %144 : vector<2x128xf32>
    %146 = arith.mulf %140, %145 : vector<2x128xf32>
    %147 = vector.extract_strided_slice %131 {offsets = [2, 0], sizes = [2, 128], strides = [1, 1]} : vector<16x128xf32> to vector<2x128xf32>
    %cst_48 = arith.constant dense<0.000000e+00> : vector<2x128xf32>
    %148 = tpu.matmul %146, %127, %cst_48 {dimension_numbers = #tpu.dot_dimension_numbers<[1], [0], [0], [1], [0, 0, 1, 1], [], []>} : vector<2x128xf32>, vector<128x128xf32>, vector<2x128xf32> -> vector<2x128xf32>
    %149 = arith.addf %147, %148 : vector<2x128xf32>
    %150 = math.tanh %149 : vector<2x128xf32>
    %151 = arith.mulf %150, %8 : vector<2x128xf32>
    %152 = arith.addf %151, %11 : vector<2x128xf32>
    %c64_i32_49 = arith.constant 64 : i32
    %153 = tpu.dynamic_rotate %152 by %c64_i32_49 dim 1 : vector<2x128xf32>, i32 -> vector<2x128xf32>
    %154 = arith.mulf %152, %153 : vector<2x128xf32>
    %c32_i32_50 = arith.constant 32 : i32
    %155 = tpu.dynamic_rotate %154 by %c32_i32_50 dim 1 : vector<2x128xf32>, i32 -> vector<2x128xf32>
    %156 = arith.mulf %152, %144 : vector<2x128xf32>
    %157 = arith.addf %155, %156 : vector<2x128xf32>
    %158 = math.tanh %157 : vector<2x128xf32>
    %159 = arith.mulf %153, %158 : vector<2x128xf32>
    %160 = vector.extract_strided_slice %131 {offsets = [4, 0], sizes = [2, 128], strides = [1, 1]} : vector<16x128xf32> to vector<2x128xf32>
    %cst_51 = arith.constant dense<0.000000e+00> : vector<2x128xf32>
    %161 = tpu.matmul %159, %127, %cst_51 {dimension_numbers = #tpu.dot_dimension_numbers<[1], [0], [0], [1], [0, 0, 1, 1], [], []>} : vector<2x128xf32>, vector<128x128xf32>, vector<2x128xf32> -> vector<2x128xf32>
    %162 = arith.addf %160, %161 : vector<2x128xf32>
    %163 = math.tanh %162 : vector<2x128xf32>
    %164 = arith.mulf %163, %8 : vector<2x128xf32>
    %165 = arith.addf %164, %11 : vector<2x128xf32>
    %c64_i32_52 = arith.constant 64 : i32
    %166 = tpu.dynamic_rotate %165 by %c64_i32_52 dim 1 : vector<2x128xf32>, i32 -> vector<2x128xf32>
    %167 = arith.mulf %165, %166 : vector<2x128xf32>
    %c32_i32_53 = arith.constant 32 : i32
    %168 = tpu.dynamic_rotate %167 by %c32_i32_53 dim 1 : vector<2x128xf32>, i32 -> vector<2x128xf32>
    %169 = arith.mulf %165, %157 : vector<2x128xf32>
    %170 = arith.addf %168, %169 : vector<2x128xf32>
    %171 = math.tanh %170 : vector<2x128xf32>
    %172 = arith.mulf %166, %171 : vector<2x128xf32>
    %173 = vector.extract_strided_slice %131 {offsets = [6, 0], sizes = [2, 128], strides = [1, 1]} : vector<16x128xf32> to vector<2x128xf32>
    %cst_54 = arith.constant dense<0.000000e+00> : vector<2x128xf32>
    %174 = tpu.matmul %172, %127, %cst_54 {dimension_numbers = #tpu.dot_dimension_numbers<[1], [0], [0], [1], [0, 0, 1, 1], [], []>} : vector<2x128xf32>, vector<128x128xf32>, vector<2x128xf32> -> vector<2x128xf32>
    %175 = arith.addf %173, %174 : vector<2x128xf32>
    %176 = math.tanh %175 : vector<2x128xf32>
    %177 = arith.mulf %176, %8 : vector<2x128xf32>
    %178 = arith.addf %177, %11 : vector<2x128xf32>
    %c64_i32_55 = arith.constant 64 : i32
    %179 = tpu.dynamic_rotate %178 by %c64_i32_55 dim 1 : vector<2x128xf32>, i32 -> vector<2x128xf32>
    %180 = arith.mulf %178, %179 : vector<2x128xf32>
    %c32_i32_56 = arith.constant 32 : i32
    %181 = tpu.dynamic_rotate %180 by %c32_i32_56 dim 1 : vector<2x128xf32>, i32 -> vector<2x128xf32>
    %182 = arith.mulf %178, %170 : vector<2x128xf32>
    %183 = arith.addf %181, %182 : vector<2x128xf32>
    %184 = math.tanh %183 : vector<2x128xf32>
    %185 = arith.mulf %179, %184 : vector<2x128xf32>
    %186 = vector.extract_strided_slice %131 {offsets = [8, 0], sizes = [2, 128], strides = [1, 1]} : vector<16x128xf32> to vector<2x128xf32>
    %cst_57 = arith.constant dense<0.000000e+00> : vector<2x128xf32>
    %187 = tpu.matmul %185, %127, %cst_57 {dimension_numbers = #tpu.dot_dimension_numbers<[1], [0], [0], [1], [0, 0, 1, 1], [], []>} : vector<2x128xf32>, vector<128x128xf32>, vector<2x128xf32> -> vector<2x128xf32>
    %188 = arith.addf %186, %187 : vector<2x128xf32>
    %189 = math.tanh %188 : vector<2x128xf32>
    %190 = arith.mulf %189, %8 : vector<2x128xf32>
    %191 = arith.addf %190, %11 : vector<2x128xf32>
    %c64_i32_58 = arith.constant 64 : i32
    %192 = tpu.dynamic_rotate %191 by %c64_i32_58 dim 1 : vector<2x128xf32>, i32 -> vector<2x128xf32>
    %193 = arith.mulf %191, %192 : vector<2x128xf32>
    %c32_i32_59 = arith.constant 32 : i32
    %194 = tpu.dynamic_rotate %193 by %c32_i32_59 dim 1 : vector<2x128xf32>, i32 -> vector<2x128xf32>
    %195 = arith.mulf %191, %183 : vector<2x128xf32>
    %196 = arith.addf %194, %195 : vector<2x128xf32>
    %197 = math.tanh %196 : vector<2x128xf32>
    %198 = arith.mulf %192, %197 : vector<2x128xf32>
    %199 = vector.extract_strided_slice %131 {offsets = [10, 0], sizes = [2, 128], strides = [1, 1]} : vector<16x128xf32> to vector<2x128xf32>
    %cst_60 = arith.constant dense<0.000000e+00> : vector<2x128xf32>
    %200 = tpu.matmul %198, %127, %cst_60 {dimension_numbers = #tpu.dot_dimension_numbers<[1], [0], [0], [1], [0, 0, 1, 1], [], []>} : vector<2x128xf32>, vector<128x128xf32>, vector<2x128xf32> -> vector<2x128xf32>
    %201 = arith.addf %199, %200 : vector<2x128xf32>
    %202 = math.tanh %201 : vector<2x128xf32>
    %203 = arith.mulf %202, %8 : vector<2x128xf32>
    %204 = arith.addf %203, %11 : vector<2x128xf32>
    %c64_i32_61 = arith.constant 64 : i32
    %205 = tpu.dynamic_rotate %204 by %c64_i32_61 dim 1 : vector<2x128xf32>, i32 -> vector<2x128xf32>
    %206 = arith.mulf %204, %205 : vector<2x128xf32>
    %c32_i32_62 = arith.constant 32 : i32
    %207 = tpu.dynamic_rotate %206 by %c32_i32_62 dim 1 : vector<2x128xf32>, i32 -> vector<2x128xf32>
    %208 = arith.mulf %204, %196 : vector<2x128xf32>
    %209 = arith.addf %207, %208 : vector<2x128xf32>
    %210 = math.tanh %209 : vector<2x128xf32>
    %211 = arith.mulf %205, %210 : vector<2x128xf32>
    %212 = vector.extract_strided_slice %131 {offsets = [12, 0], sizes = [2, 128], strides = [1, 1]} : vector<16x128xf32> to vector<2x128xf32>
    %cst_63 = arith.constant dense<0.000000e+00> : vector<2x128xf32>
    %213 = tpu.matmul %211, %127, %cst_63 {dimension_numbers = #tpu.dot_dimension_numbers<[1], [0], [0], [1], [0, 0, 1, 1], [], []>} : vector<2x128xf32>, vector<128x128xf32>, vector<2x128xf32> -> vector<2x128xf32>
    %214 = arith.addf %212, %213 : vector<2x128xf32>
    %215 = math.tanh %214 : vector<2x128xf32>
    %216 = arith.mulf %215, %8 : vector<2x128xf32>
    %217 = arith.addf %216, %11 : vector<2x128xf32>
    %c64_i32_64 = arith.constant 64 : i32
    %218 = tpu.dynamic_rotate %217 by %c64_i32_64 dim 1 : vector<2x128xf32>, i32 -> vector<2x128xf32>
    %219 = arith.mulf %217, %218 : vector<2x128xf32>
    %c32_i32_65 = arith.constant 32 : i32
    %220 = tpu.dynamic_rotate %219 by %c32_i32_65 dim 1 : vector<2x128xf32>, i32 -> vector<2x128xf32>
    %221 = arith.mulf %217, %209 : vector<2x128xf32>
    %222 = arith.addf %220, %221 : vector<2x128xf32>
    %223 = math.tanh %222 : vector<2x128xf32>
    %224 = arith.mulf %218, %223 : vector<2x128xf32>
    %225 = vector.extract_strided_slice %131 {offsets = [14, 0], sizes = [2, 128], strides = [1, 1]} : vector<16x128xf32> to vector<2x128xf32>
    %cst_66 = arith.constant dense<0.000000e+00> : vector<2x128xf32>
    %226 = tpu.matmul %224, %127, %cst_66 {dimension_numbers = #tpu.dot_dimension_numbers<[1], [0], [0], [1], [0, 0, 1, 1], [], []>} : vector<2x128xf32>, vector<128x128xf32>, vector<2x128xf32> -> vector<2x128xf32>
    %227 = arith.addf %225, %226 : vector<2x128xf32>
    %228 = math.tanh %227 : vector<2x128xf32>
    %229 = arith.mulf %228, %8 : vector<2x128xf32>
    %230 = arith.addf %229, %11 : vector<2x128xf32>
    %c64_i32_67 = arith.constant 64 : i32
    %231 = tpu.dynamic_rotate %230 by %c64_i32_67 dim 1 : vector<2x128xf32>, i32 -> vector<2x128xf32>
    %232 = arith.mulf %230, %231 : vector<2x128xf32>
    %c32_i32_68 = arith.constant 32 : i32
    %233 = tpu.dynamic_rotate %232 by %c32_i32_68 dim 1 : vector<2x128xf32>, i32 -> vector<2x128xf32>
    %234 = arith.mulf %230, %222 : vector<2x128xf32>
    %235 = arith.addf %233, %234 : vector<2x128xf32>
    %236 = math.tanh %235 : vector<2x128xf32>
    %237 = arith.mulf %231, %236 : vector<2x128xf32>
    %c0_69 = arith.constant 0 : index
    %c0_70 = arith.constant 0 : index
    %238 = vector.load %arg7[%c0_69, %c0_70] : memref<128x128xf32, #tpu.memory_space<vmem>>, vector<128x128xf32>
    %cst_71 = arith.constant dense<0.000000e+00> : vector<2x128xf32>
    %239 = tpu.matmul %237, %238, %cst_71 {dimension_numbers = #tpu.dot_dimension_numbers<[1], [0], [0], [1], [0, 0, 1, 1], [], []>} : vector<2x128xf32>, vector<128x128xf32>, vector<2x128xf32> -> vector<2x128xf32>
    %c0_72 = arith.constant 0 : index
    %c0_73 = arith.constant 0 : index
    %240 = vector.load %arg8[%c0_72, %c0_73] : memref<1x128xf32, #tpu.memory_space<vmem>>, vector<1x128xf32>
    %241 = vector.broadcast %240 : vector<1x128xf32> to vector<2x128xf32>
    %242 = arith.addf %239, %241 : vector<2x128xf32>
    %c0_74 = arith.constant 0 : index
    %c0_75 = arith.constant 0 : index
    %243 = vector.load %arg9[%c0_74, %c0_75] : memref<2x128xf32, #tpu.memory_space<vmem>>, vector<2x128xf32>
    tpu.vector_store %arg9[%c0_74, %c0_75], %242 {strides = array<i32>} : memref<2x128xf32, #tpu.memory_space<vmem>>, vector<2x128xf32>,
    return
  }
}

</mosaic_0001>

<llo_original>
// kernel: lstm_model_forward.1
$region0: #{lstm_model_forward.1}
  #allocation0 [shape = 'u32[]', space=smem, size = 0x4, offset = 0x4, fixed_abs, tag = 'smem constant byte address 0x4 - core index']
  #allocation1 [shape = 'u32[144,128]{1,0:T(1,128)}', space=vmem, size = 0x12000, scoped, tag = 'internal scratch']
  %s0 = inlined_call_operand.vmem [shape: f32[16,16], index: 0, kind: input, shape index: {}]
  %s1 = inlined_call_operand.vmem [shape: f32[16,128], index: 1, kind: input, shape index: {}]
  %s2 = inlined_call_operand.hbm [shape: f32[128,128], index: 2, kind: input, shape index: {}]
  %s3 = inlined_call_operand.vmem [shape: f32[1,128], index: 3, kind: input, shape index: {}]
  %s4 = inlined_call_operand.hbm [shape: f32[128,128], index: 4, kind: input, shape index: {}]
  %s5 = inlined_call_operand.hbm [shape: f32[128,128], index: 5, kind: input, shape index: {}]
  %s6 = inlined_call_operand.vmem [shape: f32[1,128], index: 6, kind: input, shape index: {}]
  %s7 = inlined_call_operand.hbm [shape: f32[128,128], index: 7, kind: input, shape index: {}]
  %s8 = inlined_call_operand.vmem [shape: f32[1,128], index: 8, kind: input, shape index: {}]
  %s9 = inlined_call_operand.hbm [shape: f32[2,128], index: 9, kind: output, shape index: {}]
  %s10 = sld [smem:[#allocation0]]
  $region62: #{lstm_model_forward.1} parent=0
    _
  %s12 = ssub.s32 1, %s10
  %s13 = scalar_select 0, %s12, %s10
  $region1: #{lstm_model_forward.1} parent=0
    #allocation2 [shape = 'u8[65536]{0}', space=vmem, size = 0x10000, scoped, tag = 'input window, operand 2, single buffered']
    #allocation3 [shape = 's32[1]{0}', space=sflag, size = 0x4, scoped, tag = 'scoped memory for lstm_model_forward.1']
    #allocation4 [shape = 's32[1]{0}', space=sflag, size = 0x4, scoped, tag = 'scoped memory for lstm_model_forward.1']
    #allocation5 [shape = 'u8[65536]{0}', space=vmem, size = 0x10000, scoped, tag = 'input window, operand 4, single buffered']
    #allocation6 [shape = 's32[1]{0}', space=sflag, size = 0x4, scoped, tag = 'scoped memory for lstm_model_forward.1']
    #allocation7 [shape = 'u8[65536]{0}', space=vmem, size = 0x10000, scoped, tag = 'input window, operand 5, single buffered']
    #allocation8 [shape = 'u8[65536]{0}', space=vmem, size = 0x10000, scoped, tag = 'input window, operand 7, single buffered']
    #allocation9 [shape = 's32[1]{0}', space=sflag, size = 0x4, scoped, tag = 'scoped memory for lstm_model_forward.1']
    #allocation10 [shape = 'u8[1024]{0}', space=vmem, size = 0x400, scoped, tag = 'output window, operand 0, single buffered']
    %14 = vsyncpa [#allocation3], 0
    %15 = vsyncpa [#allocation6], 0
    %16 = vsyncpa [#allocation9], 0
    %17 = vsyncpa [#allocation4], 0
    // Predicated region
    $region2: #{lstm_model_forward.1} parent=1 // pred_check
      _
    $region3: #{lstm_model_forward.1} parent=1 // pred_check_branch
      %19 = sbr.rel (0) target = $region5
    $region4: #{lstm_model_forward.1} parent=1 // pred_region
      _
    $region5: #{lstm_model_forward.1} parent=1 // pred_fallthru
      _
    // Predicated region
    $region6: #{lstm_model_forward.1} parent=1 // pred_check
      _
    $region7: #{lstm_model_forward.1} parent=1 // pred_check_branch
      %21 = sbr.rel (0) target = $region9
    $region8: #{lstm_model_forward.1} parent=1 // pred_region
      _
    $region9: #{lstm_model_forward.1} parent=1 // pred_fallthru
      _
    // Predicated region
    $region10: #{lstm_model_forward.1} parent=1 // pred_check
      _
    $region11: #{lstm_model_forward.1} parent=1 // pred_check_branch
      %23 = sbr.rel (0) target = $region13
    $region12: #{lstm_model_forward.1} parent=1 // pred_region
      %s25 = ssub.s32 2048, 2048
      %26 = vsyncadd [#allocation3], %s25
      %s27 = sshll.u32 [#allocation2], 4
      %s28 = int_to_ptr.vmem [resolvable:$true] %s27
      %33 = dma.hbm_to_vmem [thread:$0]  %s2, 2048, %s28, [#allocation3], 128, 128, 8
    $region13: #{lstm_model_forward.1} parent=1 // pred_fallthru
      _
    // Predicated region
    $region14: #{lstm_model_forward.1} parent=1 // pred_check
      _
    $region15: #{lstm_model_forward.1} parent=1 // pred_check_branch
      %35 = sbr.rel (0) target = $region17
    $region16: #{lstm_model_forward.1} parent=1 // pred_region
      _
    $region17: #{lstm_model_forward.1} parent=1 // pred_fallthru
      _
    // Predicated region
    $region18: #{lstm_model_forward.1} parent=1 // pred_check
      _
    $region19: #{lstm_model_forward.1} parent=1 // pred_check_branch
      %37 = sbr.rel (0) target = $region21
    $region20: #{lstm_model_forward.1} parent=1 // pred_region
      %s39 = ssub.s32 2048, 2048
      %40 = vsyncadd [#allocation6], %s39
      %s41 = sshll.u32 [#allocation5], 4
      %s42 = int_to_ptr.vmem [resolvable:$true] %s41
      %47 = dma.hbm_to_vmem [thread:$0]  %s4, 2048, %s42, [#allocation6], 128, 128, 8
    $region21: #{lstm_model_forward.1} parent=1 // pred_fallthru
      _
    // Predicated region
    $region22: #{lstm_model_forward.1} parent=1 // pred_check
      _
    $region23: #{lstm_model_forward.1} parent=1 // pred_check_branch
      %49 = sbr.rel (0) target = $region25
    $region24: #{lstm_model_forward.1} parent=1 // pred_region
      %s51 = ssub.s32 2048, 2048
      %52 = vsyncadd [#allocation6], %s51
      %s53 = sshll.u32 [#allocation7], 4
      %s54 = int_to_ptr.vmem [resolvable:$true] %s53
      %59 = dma.hbm_to_vmem [thread:$0]  %s5, 2048, %s54, [#allocation6], 128, 128, 8
    $region25: #{lstm_model_forward.1} parent=1 // pred_fallthru
      _
    // Predicated region
    $region26: #{lstm_model_forward.1} parent=1 // pred_check
      _
    $region27: #{lstm_model_forward.1} parent=1 // pred_check_branch
      %61 = sbr.rel (0) target = $region29
    $region28: #{lstm_model_forward.1} parent=1 // pred_region
      _
    $region29: #{lstm_model_forward.1} parent=1 // pred_fallthru
      _
    // Predicated region
    $region30: #{lstm_model_forward.1} parent=1 // pred_check
      _
    $region31: #{lstm_model_forward.1} parent=1 // pred_check_branch
      %63 = sbr.rel (0) target = $region33
    $region32: #{lstm_model_forward.1} parent=1 // pred_region
      %s65 = ssub.s32 2048, 2048
      %66 = vsyncadd [#allocation9], %s65
      %s67 = sshll.u32 [#allocation8], 4
      %s68 = int_to_ptr.vmem [resolvable:$true] %s67
      %73 = dma.hbm_to_vmem [thread:$0]  %s7, 2048, %s68, [#allocation9], 128, 128, 8
    $region33: #{lstm_model_forward.1} parent=1 // pred_fallthru
      _
    // Predicated region
    $region34: #{lstm_model_forward.1} parent=1 // pred_check
      _
    $region35: #{lstm_model_forward.1} parent=1 // pred_check_branch
      %75 = sbr.rel (0) target = $region37
    $region36: #{lstm_model_forward.1} parent=1 // pred_region
      _
    $region37: #{lstm_model_forward.1} parent=1 // pred_fallthru
      _
    // Predicated region
    $region38: #{lstm_model_forward.1} parent=1 // pred_check
      _
    $region39: #{lstm_model_forward.1} parent=1 // pred_check_branch
      %77 = sbr.rel (0) target = $region41
    $region40: #{lstm_model_forward.1} parent=1 // pred_region
      %78 = dma.done [#allocation3], 2048
    $region41: #{lstm_model_forward.1} parent=1 // pred_fallthru
      _
    // Predicated region
    $region42: #{lstm_model_forward.1} parent=1 // pred_check
      _
    $region43: #{lstm_model_forward.1} parent=1 // pred_check_branch
      %80 = sbr.rel (0) target = $region45
    $region44: #{lstm_model_forward.1} parent=1 // pred_region
      %81 = dma.done [#allocation6], 2048
    $region45: #{lstm_model_forward.1} parent=1 // pred_fallthru
      _
    // Predicated region
    $region46: #{lstm_model_forward.1} parent=1 // pred_check
      _
    $region47: #{lstm_model_forward.1} parent=1 // pred_check_branch
      %83 = sbr.rel (0) target = $region49
    $region48: #{lstm_model_forward.1} parent=1 // pred_region
      %84 = dma.done [#allocation6], 2048
    $region49: #{lstm_model_forward.1} parent=1 // pred_fallthru
      _
    // Predicated region
    $region50: #{lstm_model_forward.1} parent=1 // pred_check
      _
    $region51: #{lstm_model_forward.1} parent=1 // pred_check_branch
      %86 = sbr.rel (0) target = $region53
    $region52: #{lstm_model_forward.1} parent=1 // pred_region
      %87 = dma.done [#allocation9], 2048
    $region53: #{lstm_model_forward.1} parent=1 // pred_fallthru
      _
    %v88 = vlaneseq
    %v89 = vand.u32 %v88, 127
    %vm90 = vcmp.ge.s32.totalorder %v89, 64
    %vm91 = vcmp.lt.s32.totalorder %v89, 96
    %vm92 = vmand %vm90, %vm91
    %v93 = vsel %vm92, 1.0, 0.5
    %v94 = vsel %vm92, 0.0, 0.5
    %v95 = vld [vmem:[%s0] sm:$0xff]
    %v96 = vld [vmem:[%s0 + $0x8] sm:$0xff]
    %v97 = vld [vmem:[%s1] sm:$0xff]
    %v98 = vld [vmem:[%s1 + $0x8] sm:$0xff]
    %v99 = vld [vmem:[#allocation2] sm:$0xff]
    %v100 = vld [vmem:[#allocation2 + $0x8] sm:$0xff]
    %v101 = vld [vmem:[#allocation2 + $0x10] sm:$0xff]
    %v102 = vld [vmem:[#allocation2 + $0x18] sm:$0xff]
    %v103 = vld [vmem:[#allocation2 + $0x20] sm:$0xff]
    %v104 = vld [vmem:[#allocation2 + $0x28] sm:$0xff]
    %v105 = vld [vmem:[#allocation2 + $0x30] sm:$0xff]
    %v106 = vld [vmem:[#allocation2 + $0x38] sm:$0xff]
    %v107 = vld [vmem:[#allocation2 + $0x40] sm:$0xff]
    %v108 = vld [vmem:[#allocation2 + $0x48] sm:$0xff]
    %v109 = vld [vmem:[#allocation2 + $0x50] sm:$0xff]
    %v110 = vld [vmem:[#allocation2 + $0x58] sm:$0xff]
    %v111 = vld [vmem:[#allocation2 + $0x60] sm:$0xff]
    %v112 = vld [vmem:[#allocation2 + $0x68] sm:$0xff]
    %v113 = vld [vmem:[#allocation2 + $0x70] sm:$0xff]
    %v114 = vld [vmem:[#allocation2 + $0x78] sm:$0xff]
    %v115 = vld [vmem:[%s3] sm:$0x1]
    %v117 = vlaneseq
    %v118 = vshrl.u32 %v117, 7
    %v119 = vsub.s32 0, %v118
    %v120 = vrot.slane %v115, %v119
    %vm122 = vcmask 130048
    %v124 = vsel %vm122, %v95, 0
    %v127 = vsel %vm122, %v96, 0
    %129 = vmatprep.subr.mxu0 0.0
    %130 = vmatpush1.msra.mxu0 0.0
    %131 = vmatprep.subr.mxu0 0.0
    %132 = vmatpush1.msra.mxu0 0.0
    %133 = vmatprep.subr.mxu0 0.0
    %134 = vmatpush1.msra.mxu0 0.0
    %135 = vmatprep.subr.mxu0 0.0
    %136 = vmatpush1.msra.mxu0 0.0
    %137 = vmatprep.subr.mxu0 0.0
    %138 = vmatpush1.msra.mxu0 0.0
    %139 = vmatprep.subr.mxu0 0.0
    %140 = vmatpush1.msra.mxu0 0.0
    %141 = vmatprep.subr.mxu0 0.0
    %142 = vmatpush1.msra.mxu0 0.0
    %143 = vmatprep.subr.mxu0 0.0
    %144 = vmatpush1.msra.mxu0 0.0
    %145 = vmatprep.subr.mxu0 0.0
    %146 = vmatpush1.msra.mxu0 0.0
    %147 = vmatprep.subr.mxu0 0.0
    %148 = vmatpush1.msra.mxu0 0.0
    %149 = vmatprep.subr.mxu0 0.0
    %150 = vmatpush1.msra.mxu0 0.0
    %151 = vmatprep.subr.mxu0 0.0
    %152 = vmatpush1.msra.mxu0 0.0
    %153 = vmatprep.subr.mxu0 0.0
    %154 = vmatpush1.msra.mxu0 0.0
    %155 = vmatprep.subr.mxu0 0.0
    %156 = vmatpush1.msra.mxu0 0.0
    %157 = vmatprep.subr.mxu0 0.0
    %158 = vmatpush1.msra.mxu0 %v98
    %159 = vmatprep.subr.mxu0 0.0
    %160 = vmatpush1.msra.mxu0 %v97
    %161 = vmatprep.subr.mxu0 0.0
    %162 = vmatpush2.msra.mxu0 0.0
    %163 = vmatprep.subr.mxu0 0.0
    %164 = vmatpush2.msra.mxu0 0.0
    %165 = vmatprep.subr.mxu0 0.0
    %166 = vmatpush2.msra.mxu0 0.0
    %167 = vmatprep.subr.mxu0 0.0
    %168 = vmatpush2.msra.mxu0 0.0
    %169 = vmatprep.subr.mxu0 0.0
    %170 = vmatpush2.msra.mxu0 0.0
    %171 = vmatprep.subr.mxu0 0.0
    %172 = vmatpush2.msra.mxu0 0.0
    %173 = vmatprep.subr.mxu0 0.0
    %174 = vmatpush2.msra.mxu0 0.0
    %175 = vmatprep.subr.mxu0 0.0
    %176 = vmatpush2.msra.mxu0 0.0
    %177 = vmatprep.subr.mxu0 0.0
    %178 = vmatpush2.msra.mxu0 0.0
    %179 = vmatprep.subr.mxu0 0.0
    %180 = vmatpush2.msra.mxu0 0.0
    %181 = vmatprep.subr.mxu0 0.0
    %182 = vmatpush2.msra.mxu0 0.0
    %183 = vmatprep.subr.mxu0 0.0
    %184 = vmatpush2.msra.mxu0 0.0
    %185 = vmatprep.subr.mxu0 0.0
    %186 = vmatpush2.msra.mxu0 0.0
    %187 = vmatprep.subr.mxu0 0.0
    %188 = vmatpush2.msra.mxu0 0.0
    %189 = vmatprep.subr.mxu0 0.0
    %190 = vmatpush2.msra.mxu0 0.0
    %191 = vmatprep.subr.mxu0 0.0
    %192 = vmatpush2.msra.mxu0 0.0
    %193 = vmatprep.mubr.f32.mxu0 0.0
    %194 = vmatmul.mubr.f32.gmra.mxu0 %v124
    %v195 = vpop.f32.mrf.mxu0
    %v196 = vadd.f32 %v120, %v195
    %v197 = vpop.f32.mrf.mxu0
    %198 = vmatprep.mubr.f32.mxu0 0.0
    %199 = vmatmul.mubr.f32.gmra.mxu0 %v127
    %v200 = vpop.f32.mrf.mxu0
    %v201 = vadd.f32 %v120, %v200
    %v202 = vpop.f32.mrf.mxu0
    %203 = vdwg.mxu0
    %204 = vmatprep.subr.mxu0 0.0
    %205 = vmatpush1.msra.mxu0 %v114
    %206 = vmatprep.subr.mxu0 0.0
    %207 = vmatpush1.msra.mxu0 %v113
    %208 = vmatprep.subr.mxu0 0.0
    %209 = vmatpush1.msra.mxu0 %v112
    %210 = vmatprep.subr.mxu0 0.0
    %211 = vmatpush1.msra.mxu0 %v111
    %212 = vmatprep.subr.mxu0 0.0
    %213 = vmatpush1.msra.mxu0 %v110
    %214 = vmatprep.subr.mxu0 0.0
    %215 = vmatpush1.msra.mxu0 %v109
    %216 = vmatprep.subr.mxu0 0.0
    %217 = vmatpush1.msra.mxu0 %v108
    %218 = vmatprep.subr.mxu0 0.0
    %219 = vmatpush1.msra.mxu0 %v107
    %220 = vmatprep.subr.mxu0 0.0
    %221 = vmatpush1.msra.mxu0 %v106
    %222 = vmatprep.subr.mxu0 0.0
    %223 = vmatpush1.msra.mxu0 %v105
    %224 = vmatprep.subr.mxu0 0.0
    %225 = vmatpush1.msra.mxu0 %v104
    %226 = vmatprep.subr.mxu0 0.0
    %227 = vmatpush1.msra.mxu0 %v103
    %228 = vmatprep.subr.mxu0 0.0
    %229 = vmatpush1.msra.mxu0 %v102
    %230 = vmatprep.subr.mxu0 0.0
    %231 = vmatpush1.msra.mxu0 %v101
    %232 = vmatprep.subr.mxu0 0.0
    %233 = vmatpush1.msra.mxu0 %v100
    %234 = vmatprep.subr.mxu0 0.0
    %235 = vmatpush1.msra.mxu0 %v99
    %236 = vmatprep.subr.mxu0 0.0
    %237 = vmatpush2.msra.mxu0 0.0
    %238 = vmatprep.subr.mxu0 0.0
    %239 = vmatpush2.msra.mxu0 0.0
    %240 = vmatprep.subr.mxu0 0.0
    %241 = vmatpush2.msra.mxu0 0.0
    %242 = vmatprep.subr.mxu0 0.0
    %243 = vmatpush2.msra.mxu0 0.0
    %244 = vmatprep.subr.mxu0 0.0
    %245 = vmatpush2.msra.mxu0 0.0
    %246 = vmatprep.subr.mxu0 0.0
    %247 = vmatpush2.msra.mxu0 0.0
    %248 = vmatprep.subr.mxu0 0.0
    %249 = vmatpush2.msra.mxu0 0.0
    %250 = vmatprep.subr.mxu0 0.0
    %251 = vmatpush2.msra.mxu0 0.0
    %252 = vmatprep.subr.mxu0 0.0
    %253 = vmatpush2.msra.mxu0 0.0
    %254 = vmatprep.subr.mxu0 0.0
    %255 = vmatpush2.msra.mxu0 0.0
    %256 = vmatprep.subr.mxu0 0.0
    %257 = vmatpush2.msra.mxu0 0.0
    %258 = vmatprep.subr.mxu0 0.0
    %259 = vmatpush2.msra.mxu0 0.0
    %260 = vmatprep.subr.mxu0 0.0
    %261 = vmatpush2.msra.mxu0 0.0
    %262 = vmatprep.subr.mxu0 0.0
    %263 = vmatpush2.msra.mxu0 0.0
    %264 = vmatprep.subr.mxu0 0.0
    %265 = vmatpush2.msra.mxu0 0.0
    %266 = vmatprep.subr.mxu0 0.0
    %267 = vmatpush2.msra.mxu0 0.0
    %268 = vmatprep.mubr.f32.mxu0 0.0
    %269 = vmatmul.mubr.f32.gmra.mxu0 0.0
    %v270 = vpop.f32.mrf.mxu0
    %v271 = vadd.f32 0.0, %v270
    %v272 = vpop.f32.mrf.mxu0
    %273 = vdwg.mxu0
    %v274 = vadd.f32 %v196, %v271
    %v275 = vtanh.pop %v274
    %v276 = vmul.f32 %v275, %v93
    %v277 = vadd.f32 %v276, %v94
    %278 = vrot.lane.b32.xlu0 %v277, 64
    %v279 = vpop.permute.xlu0 %278
    %v280 = vmul.f32 %v277, %v279
    %281 = vrot.lane.b32.xlu0 %v280, 32
    %v282 = vpop.permute.xlu0 %281
    %v283 = vmul.f32 %v277, 0.0
    %v284 = vadd.f32 %v282, %v283
    %v285 = vtanh.pop %v284
    %v286 = vmul.f32 %v279, %v285
    %287 = vmatprep.subr.mxu0 0.0
    %288 = vmatpush1.msra.mxu0 %v114
    %289 = vmatprep.subr.mxu0 0.0
    %290 = vmatpush1.msra.mxu0 %v113
    %291 = vmatprep.subr.mxu0 0.0
    %292 = vmatpush1.msra.mxu0 %v112
    %293 = vmatprep.subr.mxu0 0.0
    %294 = vmatpush1.msra.mxu0 %v111
    %295 = vmatprep.subr.mxu0 0.0
    %296 = vmatpush1.msra.mxu0 %v110
    %297 = vmatprep.subr.mxu0 0.0
    %298 = vmatpush1.msra.mxu0 %v109
    %299 = vmatprep.subr.mxu0 0.0
    %300 = vmatpush1.msra.mxu0 %v108
    %301 = vmatprep.subr.mxu0 0.0
    %302 = vmatpush1.msra.mxu0 %v107
    %303 = vmatprep.subr.mxu0 0.0
    %304 = vmatpush1.msra.mxu0 %v106
    %305 = vmatprep.subr.mxu0 0.0
    %306 = vmatpush1.msra.mxu0 %v105
    %307 = vmatprep.subr.mxu0 0.0
    %308 = vmatpush1.msra.mxu0 %v104
    %309 = vmatprep.subr.mxu0 0.0
    %310 = vmatpush1.msra.mxu0 %v103
    %311 = vmatprep.subr.mxu0 0.0
    %312 = vmatpush1.msra.mxu0 %v102
    %313 = vmatprep.subr.mxu0 0.0
    %314 = vmatpush1.msra.mxu0 %v101
    %315 = vmatprep.subr.mxu0 0.0
    %316 = vmatpush1.msra.mxu0 %v100
    %317 = vmatprep.subr.mxu0 0.0
    %318 = vmatpush1.msra.mxu0 %v99
    %319 = vmatprep.subr.mxu0 0.0
    %320 = vmatpush2.msra.mxu0 0.0
    %321 = vmatprep.subr.mxu0 0.0
    %322 = vmatpush2.msra.mxu0 0.0
    %323 = vmatprep.subr.mxu0 0.0
    %324 = vmatpush2.msra.mxu0 0.0
    %325 = vmatprep.subr.mxu0 0.0
    %326 = vmatpush2.msra.mxu0 0.0
    %327 = vmatprep.subr.mxu0 0.0
    %328 = vmatpush2.msra.mxu0 0.0
    %329 = vmatprep.subr.mxu0 0.0
    %330 = vmatpush2.msra.mxu0 0.0
    %331 = vmatprep.subr.mxu0 0.0
    %332 = vmatpush2.msra.mxu0 0.0
    %333 = vmatprep.subr.mxu0 0.0
    %334 = vmatpush2.msra.mxu0 0.0
    %335 = vmatprep.subr.mxu0 0.0
    %336 = vmatpush2.msra.mxu0 0.0
    %337 = vmatprep.subr.mxu0 0.0
    %338 = vmatpush2.msra.mxu0 0.0
    %339 = vmatprep.subr.mxu0 0.0
    %340 = vmatpush2.msra.mxu0 0.0
    %341 = vmatprep.subr.mxu0 0.0
    %342 = vmatpush2.msra.mxu0 0.0
    %343 = vmatprep.subr.mxu0 0.0
    %344 = vmatpush2.msra.mxu0 0.0
    %345 = vmatprep.subr.mxu0 0.0
    %346 = vmatpush2.msra.mxu0 0.0
    %347 = vmatprep.subr.mxu0 0.0
    %348 = vmatpush2.msra.mxu0 0.0
    %349 = vmatprep.subr.mxu0 0.0
    %350 = vmatpush2.msra.mxu0 0.0
    %351 = vmatprep.mubr.f32.mxu0 0.0
    %352 = vmatmul.mubr.f32.gmra.mxu0 %v286
    %v353 = vpop.f32.mrf.mxu0
    %v354 = vadd.f32 0.0, %v353
    %v355 = vpop.f32.mrf.mxu0
    %356 = vdwg.mxu0
    %v358 = vrot.slane %v354, 6
    %v360 = vadd.f32 %v196, %v358
    %v361 = vtanh.pop %v360
    %v362 = vmul.f32 %v361, %v93
    %v363 = vadd.f32 %v362, %v94
    %v365 = vrot.slane %v363, 2
    %367 = vrot.lane.b32.xlu0 %v365, 64
    %v368 = vpop.permute.xlu0 %367
    %v370 = vrot.slane %v368, 6
    %v372 = vmul.f32 %v363, %v370
    %v374 = vrot.slane %v372, 2
    %376 = vrot.lane.b32.xlu0 %v374, 32
    %v377 = vpop.permute.xlu0 %376
    %v379 = vrot.slane %v284, 6
    %v381 = vmul.f32 %v363, %v379
    %v383 = vrot.slane %v381, 2
    %v385 = vadd.f32 %v377, %v383
    %v386 = vtanh.pop %v385
    %v387 = vmul.f32 %v368, %v386
    %388 = vmatprep.subr.mxu0 0.0
    %389 = vmatpush1.msra.mxu0 %v114
    %390 = vmatprep.subr.mxu0 0.0
    %391 = vmatpush1.msra.mxu0 %v113
    %392 = vmatprep.subr.mxu0 0.0
    %393 = vmatpush1.msra.mxu0 %v112
    %394 = vmatprep.subr.mxu0 0.0
    %395 = vmatpush1.msra.mxu0 %v111
    %396 = vmatprep.subr.mxu0 0.0
    %397 = vmatpush1.msra.mxu0 %v110
    %398 = vmatprep.subr.mxu0 0.0
    %399 = vmatpush1.msra.mxu0 %v109
    %400 = vmatprep.subr.mxu0 0.0
    %401 = vmatpush1.msra.mxu0 %v108
    %402 = vmatprep.subr.mxu0 0.0
    %403 = vmatpush1.msra.mxu0 %v107
    %404 = vmatprep.subr.mxu0 0.0
    %405 = vmatpush1.msra.mxu0 %v106
    %406 = vmatprep.subr.mxu0 0.0
    %407 = vmatpush1.msra.mxu0 %v105
    %408 = vmatprep.subr.mxu0 0.0
    %409 = vmatpush1.msra.mxu0 %v104
    %410 = vmatprep.subr.mxu0 0.0
    %411 = vmatpush1.msra.mxu0 %v103
    %412 = vmatprep.subr.mxu0 0.0
    %413 = vmatpush1.msra.mxu0 %v102
    %414 = vmatprep.subr.mxu0 0.0
    %415 = vmatpush1.msra.mxu0 %v101
    %416 = vmatprep.subr.mxu0 0.0
    %417 = vmatpush1.msra.mxu0 %v100
    %418 = vmatprep.subr.mxu0 0.0
    %419 = vmatpush1.msra.mxu0 %v99
    %420 = vmatprep.subr.mxu0 0.0
    %421 = vmatpush2.msra.mxu0 0.0
    %422 = vmatprep.subr.mxu0 0.0
    %423 = vmatpush2.msra.mxu0 0.0
    %424 = vmatprep.subr.mxu0 0.0
    %425 = vmatpush2.msra.mxu0 0.0
    %426 = vmatprep.subr.mxu0 0.0
    %427 = vmatpush2.msra.mxu0 0.0
    %428 = vmatprep.subr.mxu0 0.0
    %429 = vmatpush2.msra.mxu0 0.0
    %430 = vmatprep.subr.mxu0 0.0
    %431 = vmatpush2.msra.mxu0 0.0
    %432 = vmatprep.subr.mxu0 0.0
    %433 = vmatpush2.msra.mxu0 0.0
    %434 = vmatprep.subr.mxu0 0.0
    %435 = vmatpush2.msra.mxu0 0.0
    %436 = vmatprep.subr.mxu0 0.0
    %437 = vmatpush2.msra.mxu0 0.0
    %438 = vmatprep.subr.mxu0 0.0
    %439 = vmatpush2.msra.mxu0 0.0
    %440 = vmatprep.subr.mxu0 0.0
    %441 = vmatpush2.msra.mxu0 0.0
    %442 = vmatprep.subr.mxu0 0.0
    %443 = vmatpush2.msra.mxu0 0.0
    %444 = vmatprep.subr.mxu0 0.0
    %445 = vmatpush2.msra.mxu0 0.0
    %446 = vmatprep.subr.mxu0 0.0
    %447 = vmatpush2.msra.mxu0 0.0
    %448 = vmatprep.subr.mxu0 0.0
    %449 = vmatpush2.msra.mxu0 0.0
    %450 = vmatprep.subr.mxu0 0.0
    %451 = vmatpush2.msra.mxu0 0.0
    %452 = vmatprep.mubr.f32.mxu0 0.0
    %453 = vmatmul.mubr.f32.gmra.mxu0 %v387
    %v454 = vpop.f32.mrf.mxu0
    %v455 = vadd.f32 0.0, %v454
    %v456 = vpop.f32.mrf.mxu0
    %457 = vdwg.mxu0
    %v459 = vrot.slane %v455, 4
    %v461 = vadd.f32 %v196, %v459
    %v462 = vtanh.pop %v461
    %v463 = vmul.f32 %v462, %v93
    %v464 = vadd.f32 %v463, %v94
    %v466 = vrot.slane %v464, 4
    %468 = vrot.lane.b32.xlu0 %v466, 64
    %v469 = vpop.permute.xlu0 %468
    %v471 = vrot.slane %v469, 4
    %v473 = vmul.f32 %v464, %v471
    %v475 = vrot.slane %v473, 4
    %477 = vrot.lane.b32.xlu0 %v475, 32
    %v478 = vpop.permute.xlu0 %477
    %v480 = vrot.slane %v385, 4
    %v482 = vmul.f32 %v464, %v480
    %v484 = vrot.slane %v482, 4
    %v486 = vadd.f32 %v478, %v484
    %v487 = vtanh.pop %v486
    %v488 = vmul.f32 %v469, %v487
    %489 = vmatprep.subr.mxu0 0.0
    %490 = vmatpush1.msra.mxu0 %v114
    %491 = vmatprep.subr.mxu0 0.0
    %492 = vmatpush1.msra.mxu0 %v113
    %493 = vmatprep.subr.mxu0 0.0
    %494 = vmatpush1.msra.mxu0 %v112
    %495 = vmatprep.subr.mxu0 0.0
    %496 = vmatpush1.msra.mxu0 %v111
    %497 = vmatprep.subr.mxu0 0.0
    %498 = vmatpush1.msra.mxu0 %v110
    %499 = vmatprep.subr.mxu0 0.0
    %500 = vmatpush1.msra.mxu0 %v109
    %501 = vmatprep.subr.mxu0 0.0
    %502 = vmatpush1.msra.mxu0 %v108
    %503 = vmatprep.subr.mxu0 0.0
    %504 = vmatpush1.msra.mxu0 %v107
    %505 = vmatprep.subr.mxu0 0.0
    %506 = vmatpush1.msra.mxu0 %v106
    %507 = vmatprep.subr.mxu0 0.0
    %508 = vmatpush1.msra.mxu0 %v105
    %509 = vmatprep.subr.mxu0 0.0
    %510 = vmatpush1.msra.mxu0 %v104
    %511 = vmatprep.subr.mxu0 0.0
    %512 = vmatpush1.msra.mxu0 %v103
    %513 = vmatprep.subr.mxu0 0.0
    %514 = vmatpush1.msra.mxu0 %v102
    %515 = vmatprep.subr.mxu0 0.0
    %516 = vmatpush1.msra.mxu0 %v101
    %517 = vmatprep.subr.mxu0 0.0
    %518 = vmatpush1.msra.mxu0 %v100
    %519 = vmatprep.subr.mxu0 0.0
    %520 = vmatpush1.msra.mxu0 %v99
    %521 = vmatprep.subr.mxu0 0.0
    %522 = vmatpush2.msra.mxu0 0.0
    %523 = vmatprep.subr.mxu0 0.0
    %524 = vmatpush2.msra.mxu0 0.0
    %525 = vmatprep.subr.mxu0 0.0
    %526 = vmatpush2.msra.mxu0 0.0
    %527 = vmatprep.subr.mxu0 0.0
    %528 = vmatpush2.msra.mxu0 0.0
    %529 = vmatprep.subr.mxu0 0.0
    %530 = vmatpush2.msra.mxu0 0.0
    %531 = vmatprep.subr.mxu0 0.0
    %532 = vmatpush2.msra.mxu0 0.0
    %533 = vmatprep.subr.mxu0 0.0
    %534 = vmatpush2.msra.mxu0 0.0
    %535 = vmatprep.subr.mxu0 0.0
    %536 = vmatpush2.msra.mxu0 0.0
    %537 = vmatprep.subr.mxu0 0.0
    %538 = vmatpush2.msra.mxu0 0.0
    %539 = vmatprep.subr.mxu0 0.0
    %540 = vmatpush2.msra.mxu0 0.0
    %541 = vmatprep.subr.mxu0 0.0
    %542 = vmatpush2.msra.mxu0 0.0
    %543 = vmatprep.subr.mxu0 0.0
    %544 = vmatpush2.msra.mxu0 0.0
    %545 = vmatprep.subr.mxu0 0.0
    %546 = vmatpush2.msra.mxu0 0.0
    %547 = vmatprep.subr.mxu0 0.0
    %548 = vmatpush2.msra.mxu0 0.0
    %549 = vmatprep.subr.mxu0 0.0
    %550 = vmatpush2.msra.mxu0 0.0
    %551 = vmatprep.subr.mxu0 0.0
    %552 = vmatpush2.msra.mxu0 0.0
    %553 = vmatprep.mubr.f32.mxu0 0.0
    %554 = vmatmul.mubr.f32.gmra.mxu0 %v488
    %v555 = vpop.f32.mrf.mxu0
    %v556 = vadd.f32 0.0, %v555
    %v557 = vpop.f32.mrf.mxu0
    %558 = vdwg.mxu0
    %v560 = vrot.slane %v556, 2
    %v562 = vadd.f32 %v196, %v560
    %v563 = vtanh.pop %v562
    %v564 = vmul.f32 %v563, %v93
    %v565 = vadd.f32 %v564, %v94
    %v567 = vrot.slane %v565, 6
    %569 = vrot.lane.b32.xlu0 %v567, 64
    %v570 = vpop.permute.xlu0 %569
    %v572 = vrot.slane %v570, 2
    %v574 = vmul.f32 %v565, %v572
    %v576 = vrot.slane %v574, 6
    %578 = vrot.lane.b32.xlu0 %v576, 32
    %v579 = vpop.permute.xlu0 %578
    %v581 = vrot.slane %v486, 2
    %v583 = vmul.f32 %v565, %v581
    %v585 = vrot.slane %v583, 6
    %v587 = vadd.f32 %v579, %v585
    %v588 = vtanh.pop %v587
    %v589 = vmul.f32 %v570, %v588
    %590 = vmatprep.subr.mxu0 0.0
    %591 = vmatpush1.msra.mxu0 %v114
    %592 = vmatprep.subr.mxu0 0.0
    %593 = vmatpush1.msra.mxu0 %v113
    %594 = vmatprep.subr.mxu0 0.0
    %595 = vmatpush1.msra.mxu0 %v112
    %596 = vmatprep.subr.mxu0 0.0
    %597 = vmatpush1.msra.mxu0 %v111
    %598 = vmatprep.subr.mxu0 0.0
    %599 = vmatpush1.msra.mxu0 %v110
    %600 = vmatprep.subr.mxu0 0.0
    %601 = vmatpush1.msra.mxu0 %v109
    %602 = vmatprep.subr.mxu0 0.0
    %603 = vmatpush1.msra.mxu0 %v108
    %604 = vmatprep.subr.mxu0 0.0
    %605 = vmatpush1.msra.mxu0 %v107
    %606 = vmatprep.subr.mxu0 0.0
    %607 = vmatpush1.msra.mxu0 %v106
    %608 = vmatprep.subr.mxu0 0.0
    %609 = vmatpush1.msra.mxu0 %v105
    %610 = vmatprep.subr.mxu0 0.0
    %611 = vmatpush1.msra.mxu0 %v104
    %612 = vmatprep.subr.mxu0 0.0
    %613 = vmatpush1.msra.mxu0 %v103
    %614 = vmatprep.subr.mxu0 0.0
    %615 = vmatpush1.msra.mxu0 %v102
    %616 = vmatprep.subr.mxu0 0.0
    %617 = vmatpush1.msra.mxu0 %v101
    %618 = vmatprep.subr.mxu0 0.0
    %619 = vmatpush1.msra.mxu0 %v100
    %620 = vmatprep.subr.mxu0 0.0
    %621 = vmatpush1.msra.mxu0 %v99
    %622 = vmatprep.subr.mxu0 0.0
    %623 = vmatpush2.msra.mxu0 0.0
    %624 = vmatprep.subr.mxu0 0.0
    %625 = vmatpush2.msra.mxu0 0.0
    %626 = vmatprep.subr.mxu0 0.0
    %627 = vmatpush2.msra.mxu0 0.0
    %628 = vmatprep.subr.mxu0 0.0
    %629 = vmatpush2.msra.mxu0 0.0
    %630 = vmatprep.subr.mxu0 0.0
    %631 = vmatpush2.msra.mxu0 0.0
    %632 = vmatprep.subr.mxu0 0.0
    %633 = vmatpush2.msra.mxu0 0.0
    %634 = vmatprep.subr.mxu0 0.0
    %635 = vmatpush2.msra.mxu0 0.0
    %636 = vmatprep.subr.mxu0 0.0
    %637 = vmatpush2.msra.mxu0 0.0
    %638 = vmatprep.subr.mxu0 0.0
    %639 = vmatpush2.msra.mxu0 0.0
    %640 = vmatprep.subr.mxu0 0.0
    %641 = vmatpush2.msra.mxu0 0.0
    %642 = vmatprep.subr.mxu0 0.0
    %643 = vmatpush2.msra.mxu0 0.0
    %644 = vmatprep.subr.mxu0 0.0
    %645 = vmatpush2.msra.mxu0 0.0
    %646 = vmatprep.subr.mxu0 0.0
    %647 = vmatpush2.msra.mxu0 0.0
    %648 = vmatprep.subr.mxu0 0.0
    %649 = vmatpush2.msra.mxu0 0.0
    %650 = vmatprep.subr.mxu0 0.0
    %651 = vmatpush2.msra.mxu0 0.0
    %652 = vmatprep.subr.mxu0 0.0
    %653 = vmatpush2.msra.mxu0 0.0
    %654 = vmatprep.mubr.f32.mxu0 0.0
    %655 = vmatmul.mubr.f32.gmra.mxu0 %v589
    %v656 = vpop.f32.mrf.mxu0
    %v657 = vadd.f32 0.0, %v656
    %v658 = vpop.f32.mrf.mxu0
    %659 = vdwg.mxu0
    %v660 = vadd.f32 %v201, %v657
    %v661 = vtanh.pop %v660
    %v662 = vmul.f32 %v661, %v93
    %v663 = vadd.f32 %v662, %v94
    %664 = vrot.lane.b32.xlu0 %v663, 64
    %v665 = vpop.permute.xlu0 %664
    %v666 = vmul.f32 %v663, %v665
    %667 = vrot.lane.b32.xlu0 %v666, 32
    %v668 = vpop.permute.xlu0 %667
    %v669 = vmul.f32 %v663, %v587
    %v670 = vadd.f32 %v668, %v669
    %v671 = vtanh.pop %v670
    %v672 = vmul.f32 %v665, %v671
    %673 = vmatprep.subr.mxu0 0.0
    %674 = vmatpush1.msra.mxu0 %v114
    %675 = vmatprep.subr.mxu0 0.0
    %676 = vmatpush1.msra.mxu0 %v113
    %677 = vmatprep.subr.mxu0 0.0
    %678 = vmatpush1.msra.mxu0 %v112
    %679 = vmatprep.subr.mxu0 0.0
    %680 = vmatpush1.msra.mxu0 %v111
    %681 = vmatprep.subr.mxu0 0.0
    %682 = vmatpush1.msra.mxu0 %v110
    %683 = vmatprep.subr.mxu0 0.0
    %684 = vmatpush1.msra.mxu0 %v109
    %685 = vmatprep.subr.mxu0 0.0
    %686 = vmatpush1.msra.mxu0 %v108
    %687 = vmatprep.subr.mxu0 0.0
    %688 = vmatpush1.msra.mxu0 %v107
    %689 = vmatprep.subr.mxu0 0.0
    %690 = vmatpush1.msra.mxu0 %v106
    %691 = vmatprep.subr.mxu0 0.0
    %692 = vmatpush1.msra.mxu0 %v105
    %693 = vmatprep.subr.mxu0 0.0
    %694 = vmatpush1.msra.mxu0 %v104
    %695 = vmatprep.subr.mxu0 0.0
    %696 = vmatpush1.msra.mxu0 %v103
    %697 = vmatprep.subr.mxu0 0.0
    %698 = vmatpush1.msra.mxu0 %v102
    %699 = vmatprep.subr.mxu0 0.0
    %700 = vmatpush1.msra.mxu0 %v101
    %701 = vmatprep.subr.mxu0 0.0
    %702 = vmatpush1.msra.mxu0 %v100
    %703 = vmatprep.subr.mxu0 0.0
    %704 = vmatpush1.msra.mxu0 %v99
    %705 = vmatprep.subr.mxu0 0.0
    %706 = vmatpush2.msra.mxu0 0.0
    %707 = vmatprep.subr.mxu0 0.0
    %708 = vmatpush2.msra.mxu0 0.0
    %709 = vmatprep.subr.mxu0 0.0
    %710 = vmatpush2.msra.mxu0 0.0
    %711 = vmatprep.subr.mxu0 0.0
    %712 = vmatpush2.msra.mxu0 0.0
    %713 = vmatprep.subr.mxu0 0.0
    %714 = vmatpush2.msra.mxu0 0.0
    %715 = vmatprep.subr.mxu0 0.0
    %716 = vmatpush2.msra.mxu0 0.0
    %717 = vmatprep.subr.mxu0 0.0
    %718 = vmatpush2.msra.mxu0 0.0
    %719 = vmatprep.subr.mxu0 0.0
    %720 = vmatpush2.msra.mxu0 0.0
    %721 = vmatprep.subr.mxu0 0.0
    %722 = vmatpush2.msra.mxu0 0.0
    %723 = vmatprep.subr.mxu0 0.0
    %724 = vmatpush2.msra.mxu0 0.0
    %725 = vmatprep.subr.mxu0 0.0
    %726 = vmatpush2.msra.mxu0 0.0
    %727 = vmatprep.subr.mxu0 0.0
    %728 = vmatpush2.msra.mxu0 0.0
    %729 = vmatprep.subr.mxu0 0.0
    %730 = vmatpush2.msra.mxu0 0.0
    %731 = vmatprep.subr.mxu0 0.0
    %732 = vmatpush2.msra.mxu0 0.0
    %733 = vmatprep.subr.mxu0 0.0
    %734 = vmatpush2.msra.mxu0 0.0
    %735 = vmatprep.subr.mxu0 0.0
    %736 = vmatpush2.msra.mxu0 0.0
    %737 = vmatprep.mubr.f32.mxu0 0.0
    %738 = vmatmul.mubr.f32.gmra.mxu0 %v672
    %v739 = vpop.f32.mrf.mxu0
    %v740 = vadd.f32 0.0, %v739
    %v741 = vpop.f32.mrf.mxu0
    %742 = vdwg.mxu0
    %v744 = vrot.slane %v740, 6
    %v746 = vadd.f32 %v201, %v744
    %v747 = vtanh.pop %v746
    %v748 = vmul.f32 %v747, %v93
    %v749 = vadd.f32 %v748, %v94
    %v751 = vrot.slane %v749, 2
    %753 = vrot.lane.b32.xlu0 %v751, 64
    %v754 = vpop.permute.xlu0 %753
    %v756 = vrot.slane %v754, 6
    %v758 = vmul.f32 %v749, %v756
    %v760 = vrot.slane %v758, 2
    %762 = vrot.lane.b32.xlu0 %v760, 32
    %v763 = vpop.permute.xlu0 %762
    %v765 = vrot.slane %v670, 6
    %v767 = vmul.f32 %v749, %v765
    %v769 = vrot.slane %v767, 2
    %v771 = vadd.f32 %v763, %v769
    %v772 = vtanh.pop %v771
    %v773 = vmul.f32 %v754, %v772
    %774 = vmatprep.subr.mxu0 0.0
    %775 = vmatpush1.msra.mxu0 %v114
    %776 = vmatprep.subr.mxu0 0.0
    %777 = vmatpush1.msra.mxu0 %v113
    %778 = vmatprep.subr.mxu0 0.0
    %779 = vmatpush1.msra.mxu0 %v112
    %780 = vmatprep.subr.mxu0 0.0
    %781 = vmatpush1.msra.mxu0 %v111
    %782 = vmatprep.subr.mxu0 0.0
    %783 = vmatpush1.msra.mxu0 %v110
    %784 = vmatprep.subr.mxu0 0.0
    %785 = vmatpush1.msra.mxu0 %v109
    %786 = vmatprep.subr.mxu0 0.0
    %787 = vmatpush1.msra.mxu0 %v108
    %788 = vmatprep.subr.mxu0 0.0
    %789 = vmatpush1.msra.mxu0 %v107
    %790 = vmatprep.subr.mxu0 0.0
    %791 = vmatpush1.msra.mxu0 %v106
    %792 = vmatprep.subr.mxu0 0.0
    %793 = vmatpush1.msra.mxu0 %v105
    %794 = vmatprep.subr.mxu0 0.0
    %795 = vmatpush1.msra.mxu0 %v104
    %796 = vmatprep.subr.mxu0 0.0
    %797 = vmatpush1.msra.mxu0 %v103
    %798 = vmatprep.subr.mxu0 0.0
    %799 = vmatpush1.msra.mxu0 %v102
    %800 = vmatprep.subr.mxu0 0.0
    %801 = vmatpush1.msra.mxu0 %v101
    %802 = vmatprep.subr.mxu0 0.0
    %803 = vmatpush1.msra.mxu0 %v100
    %804 = vmatprep.subr.mxu0 0.0
    %805 = vmatpush1.msra.mxu0 %v99
    %806 = vmatprep.subr.mxu0 0.0
    %807 = vmatpush2.msra.mxu0 0.0
    %808 = vmatprep.subr.mxu0 0.0
    %809 = vmatpush2.msra.mxu0 0.0
    %810 = vmatprep.subr.mxu0 0.0
    %811 = vmatpush2.msra.mxu0 0.0
    %812 = vmatprep.subr.mxu0 0.0
    %813 = vmatpush2.msra.mxu0 0.0
    %814 = vmatprep.subr.mxu0 0.0
    %815 = vmatpush2.msra.mxu0 0.0
    %816 = vmatprep.subr.mxu0 0.0
    %817 = vmatpush2.msra.mxu0 0.0
    %818 = vmatprep.subr.mxu0 0.0
    %819 = vmatpush2.msra.mxu0 0.0
    %820 = vmatprep.subr.mxu0 0.0
    %821 = vmatpush2.msra.mxu0 0.0
    %822 = vmatprep.subr.mxu0 0.0
    %823 = vmatpush2.msra.mxu0 0.0
    %824 = vmatprep.subr.mxu0 0.0
    %825 = vmatpush2.msra.mxu0 0.0
    %826 = vmatprep.subr.mxu0 0.0
    %827 = vmatpush2.msra.mxu0 0.0
    %828 = vmatprep.subr.mxu0 0.0
    %829 = vmatpush2.msra.mxu0 0.0
    %830 = vmatprep.subr.mxu0 0.0
    %831 = vmatpush2.msra.mxu0 0.0
    %832 = vmatprep.subr.mxu0 0.0
    %833 = vmatpush2.msra.mxu0 0.0
    %834 = vmatprep.subr.mxu0 0.0
    %835 = vmatpush2.msra.mxu0 0.0
    %836 = vmatprep.subr.mxu0 0.0
    %837 = vmatpush2.msra.mxu0 0.0
    %838 = vmatprep.mubr.f32.mxu0 0.0
    %839 = vmatmul.mubr.f32.gmra.mxu0 %v773
    %v840 = vpop.f32.mrf.mxu0
    %v841 = vadd.f32 0.0, %v840
    %v842 = vpop.f32.mrf.mxu0
    %843 = vdwg.mxu0
    %v845 = vrot.slane %v841, 4
    %v847 = vadd.f32 %v201, %v845
    %v848 = vtanh.pop %v847
    %v849 = vmul.f32 %v848, %v93
    %v850 = vadd.f32 %v849, %v94
    %v852 = vrot.slane %v850, 4
    %854 = vrot.lane.b32.xlu0 %v852, 64
    %v855 = vpop.permute.xlu0 %854
    %v857 = vrot.slane %v855, 4
    %v859 = vmul.f32 %v850, %v857
    %v861 = vrot.slane %v859, 4
    %863 = vrot.lane.b32.xlu0 %v861, 32
    %v864 = vpop.permute.xlu0 %863
    %v866 = vrot.slane %v771, 4
    %v868 = vmul.f32 %v850, %v866
    %v870 = vrot.slane %v868, 4
    %v872 = vadd.f32 %v864, %v870
    %v873 = vtanh.pop %v872
    %v874 = vmul.f32 %v855, %v873
    %875 = vmatprep.subr.mxu0 0.0
    %876 = vmatpush1.msra.mxu0 %v114
    %877 = vmatprep.subr.mxu0 0.0
    %878 = vmatpush1.msra.mxu0 %v113
    %879 = vmatprep.subr.mxu0 0.0
    %880 = vmatpush1.msra.mxu0 %v112
    %881 = vmatprep.subr.mxu0 0.0
    %882 = vmatpush1.msra.mxu0 %v111
    %883 = vmatprep.subr.mxu0 0.0
    %884 = vmatpush1.msra.mxu0 %v110
    %885 = vmatprep.subr.mxu0 0.0
    %886 = vmatpush1.msra.mxu0 %v109
    %887 = vmatprep.subr.mxu0 0.0
    %888 = vmatpush1.msra.mxu0 %v108
    %889 = vmatprep.subr.mxu0 0.0
    %890 = vmatpush1.msra.mxu0 %v107
    %891 = vmatprep.subr.mxu0 0.0
    %892 = vmatpush1.msra.mxu0 %v106
    %893 = vmatprep.subr.mxu0 0.0
    %894 = vmatpush1.msra.mxu0 %v105
    %895 = vmatprep.subr.mxu0 0.0
    %896 = vmatpush1.msra.mxu0 %v104
    %897 = vmatprep.subr.mxu0 0.0
    %898 = vmatpush1.msra.mxu0 %v103
    %899 = vmatprep.subr.mxu0 0.0
    %900 = vmatpush1.msra.mxu0 %v102
    %901 = vmatprep.subr.mxu0 0.0
    %902 = vmatpush1.msra.mxu0 %v101
    %903 = vmatprep.subr.mxu0 0.0
    %904 = vmatpush1.msra.mxu0 %v100
    %905 = vmatprep.subr.mxu0 0.0
    %906 = vmatpush1.msra.mxu0 %v99
    %907 = vmatprep.subr.mxu0 0.0
    %908 = vmatpush2.msra.mxu0 0.0
    %909 = vmatprep.subr.mxu0 0.0
    %910 = vmatpush2.msra.mxu0 0.0
    %911 = vmatprep.subr.mxu0 0.0
    %912 = vmatpush2.msra.mxu0 0.0
    %913 = vmatprep.subr.mxu0 0.0
    %914 = vmatpush2.msra.mxu0 0.0
    %915 = vmatprep.subr.mxu0 0.0
    %916 = vmatpush2.msra.mxu0 0.0
    %917 = vmatprep.subr.mxu0 0.0
    %918 = vmatpush2.msra.mxu0 0.0
    %919 = vmatprep.subr.mxu0 0.0
    %920 = vmatpush2.msra.mxu0 0.0
    %921 = vmatprep.subr.mxu0 0.0
    %922 = vmatpush2.msra.mxu0 0.0
    %923 = vmatprep.subr.mxu0 0.0
    %924 = vmatpush2.msra.mxu0 0.0
    %925 = vmatprep.subr.mxu0 0.0
    %926 = vmatpush2.msra.mxu0 0.0
    %927 = vmatprep.subr.mxu0 0.0
    %928 = vmatpush2.msra.mxu0 0.0
    %929 = vmatprep.subr.mxu0 0.0
    %930 = vmatpush2.msra.mxu0 0.0
    %931 = vmatprep.subr.mxu0 0.0
    %932 = vmatpush2.msra.mxu0 0.0
    %933 = vmatprep.subr.mxu0 0.0
    %934 = vmatpush2.msra.mxu0 0.0
    %935 = vmatprep.subr.mxu0 0.0
    %936 = vmatpush2.msra.mxu0 0.0
    %937 = vmatprep.subr.mxu0 0.0
    %938 = vmatpush2.msra.mxu0 0.0
    %939 = vmatprep.mubr.f32.mxu0 0.0
    %940 = vmatmul.mubr.f32.gmra.mxu0 %v874
    %v941 = vpop.f32.mrf.mxu0
    %v942 = vadd.f32 0.0, %v941
    %v943 = vpop.f32.mrf.mxu0
    %944 = vdwg.mxu0
    %v946 = vrot.slane %v942, 2
    %v948 = vadd.f32 %v201, %v946
    %v949 = vtanh.pop %v948
    %v950 = vmul.f32 %v949, %v93
    %v951 = vadd.f32 %v950, %v94
    %v953 = vrot.slane %v951, 6
    %955 = vrot.lane.b32.xlu0 %v953, 64
    %v956 = vpop.permute.xlu0 %955
    %v958 = vrot.slane %v956, 2
    %v960 = vmul.f32 %v951, %v958
    %v962 = vrot.slane %v960, 6
    %964 = vrot.lane.b32.xlu0 %v962, 32
    %v965 = vpop.permute.xlu0 %964
    %v967 = vrot.slane %v872, 2
    %v969 = vmul.f32 %v951, %v967
    %v971 = vrot.slane %v969, 6
    %v973 = vadd.f32 %v965, %v971
    %v974 = vtanh.pop %v973
    %v975 = vmul.f32 %v956, %v974
    %v977 = vrot.slane %v387, 6
    %v980 = vrot.slane %v488, 4
    %v983 = vrot.slane %v589, 2
    %v986 = vrot.slane %v773, 6
    %v989 = vrot.slane %v874, 4
    %v992 = vrot.slane %v975, 2
    %vm994 = vcmask 1041408
    %v995 = vsel %vm994, %v286, %v977
    %vm996 = vcmask 1043456
    %v997 = vsel %vm996, %v995, %v980
    %vm998 = vcmask 1045504
    %v999 = vsel %vm998, %v997, %v983
    %v1000 = vsel %vm994, %v672, %v986
    %v1001 = vsel %vm996, %v1000, %v989
    %v1002 = vsel %vm998, %v1001, %v992
    %v1003 = vld [vmem:[#allocation5] sm:$0xff]
    %v1004 = vld [vmem:[#allocation5 + $0x8] sm:$0xff]
    %v1005 = vld [vmem:[#allocation5 + $0x10] sm:$0xff]
    %v1006 = vld [vmem:[#allocation5 + $0x18] sm:$0xff]
    %v1007 = vld [vmem:[#allocation5 + $0x20] sm:$0xff]
    %v1008 = vld [vmem:[#allocation5 + $0x28] sm:$0xff]
    %v1009 = vld [vmem:[#allocation5 + $0x30] sm:$0xff]
    %v1010 = vld [vmem:[#allocation5 + $0x38] sm:$0xff]
    %v1011 = vld [vmem:[#allocation5 + $0x40] sm:$0xff]
    %v1012 = vld [vmem:[#allocation5 + $0x48] sm:$0xff]
    %v1013 = vld [vmem:[#allocation5 + $0x50] sm:$0xff]
    %v1014 = vld [vmem:[#allocation5 + $0x58] sm:$0xff]
    %v1015 = vld [vmem:[#allocation5 + $0x60] sm:$0xff]
    %v1016 = vld [vmem:[#allocation5 + $0x68] sm:$0xff]
    %v1017 = vld [vmem:[#allocation5 + $0x70] sm:$0xff]
    %v1018 = vld [vmem:[#allocation5 + $0x78] sm:$0xff]
    %v1019 = vld [vmem:[#allocation7] sm:$0xff]
    %v1020 = vld [vmem:[#allocation7 + $0x8] sm:$0xff]
    %v1021 = vld [vmem:[#allocation7 + $0x10] sm:$0xff]
    %v1022 = vld [vmem:[#allocation7 + $0x18] sm:$0xff]
    %v1023 = vld [vmem:[#allocation7 + $0x20] sm:$0xff]
    %v1024 = vld [vmem:[#allocation7 + $0x28] sm:$0xff]
    %v1025 = vld [vmem:[#allocation7 + $0x30] sm:$0xff]
    %v1026 = vld [vmem:[#allocation7 + $0x38] sm:$0xff]
    %v1027 = vld [vmem:[#allocation7 + $0x40] sm:$0xff]
    %v1028 = vld [vmem:[#allocation7 + $0x48] sm:$0xff]
    %v1029 = vld [vmem:[#allocation7 + $0x50] sm:$0xff]
    %v1030 = vld [vmem:[#allocation7 + $0x58] sm:$0xff]
    %v1031 = vld [vmem:[#allocation7 + $0x60] sm:$0xff]
    %v1032 = vld [vmem:[#allocation7 + $0x68] sm:$0xff]
    %v1033 = vld [vmem:[#allocation7 + $0x70] sm:$0xff]
    %v1034 = vld [vmem:[#allocation7 + $0x78] sm:$0xff]
    %v1035 = vld [vmem:[%s6] sm:$0x1]
    %v1037 = vlaneseq
    %v1038 = vshrl.u32 %v1037, 7
    %v1039 = vsub.s32 0, %v1038
    %v1040 = vrot.slane %v1035, %v1039
    %1042 = vmatprep.subr.mxu0 0.0
    %1043 = vmatpush1.msra.mxu0 %v1018
    %1044 = vmatprep.subr.mxu0 0.0
    %1045 = vmatpush1.msra.mxu0 %v1017
    %1046 = vmatprep.subr.mxu0 0.0
    %1047 = vmatpush1.msra.mxu0 %v1016
    %1048 = vmatprep.subr.mxu0 0.0
    %1049 = vmatpush1.msra.mxu0 %v1015
    %1050 = vmatprep.subr.mxu0 0.0
    %1051 = vmatpush1.msra.mxu0 %v1014
    %1052 = vmatprep.subr.mxu0 0.0
    %1053 = vmatpush1.msra.mxu0 %v1013
    %1054 = vmatprep.subr.mxu0 0.0
    %1055 = vmatpush1.msra.mxu0 %v1012
    %1056 = vmatprep.subr.mxu0 0.0
    %1057 = vmatpush1.msra.mxu0 %v1011
    %1058 = vmatprep.subr.mxu0 0.0
    %1059 = vmatpush1.msra.mxu0 %v1010
    %1060 = vmatprep.subr.mxu0 0.0
    %1061 = vmatpush1.msra.mxu0 %v1009
    %1062 = vmatprep.subr.mxu0 0.0
    %1063 = vmatpush1.msra.mxu0 %v1008
    %1064 = vmatprep.subr.mxu0 0.0
    %1065 = vmatpush1.msra.mxu0 %v1007
    %1066 = vmatprep.subr.mxu0 0.0
    %1067 = vmatpush1.msra.mxu0 %v1006
    %1068 = vmatprep.subr.mxu0 0.0
    %1069 = vmatpush1.msra.mxu0 %v1005
    %1070 = vmatprep.subr.mxu0 0.0
    %1071 = vmatpush1.msra.mxu0 %v1004
    %1072 = vmatprep.subr.mxu0 0.0
    %1073 = vmatpush1.msra.mxu0 %v1003
    %1074 = vmatprep.subr.mxu0 0.0
    %1075 = vmatpush2.msra.mxu0 0.0
    %1076 = vmatprep.subr.mxu0 0.0
    %1077 = vmatpush2.msra.mxu0 0.0
    %1078 = vmatprep.subr.mxu0 0.0
    %1079 = vmatpush2.msra.mxu0 0.0
    %1080 = vmatprep.subr.mxu0 0.0
    %1081 = vmatpush2.msra.mxu0 0.0
    %1082 = vmatprep.subr.mxu0 0.0
    %1083 = vmatpush2.msra.mxu0 0.0
    %1084 = vmatprep.subr.mxu0 0.0
    %1085 = vmatpush2.msra.mxu0 0.0
    %1086 = vmatprep.subr.mxu0 0.0
    %1087 = vmatpush2.msra.mxu0 0.0
    %1088 = vmatprep.subr.mxu0 0.0
    %1089 = vmatpush2.msra.mxu0 0.0
    %1090 = vmatprep.subr.mxu0 0.0
    %1091 = vmatpush2.msra.mxu0 0.0
    %1092 = vmatprep.subr.mxu0 0.0
    %1093 = vmatpush2.msra.mxu0 0.0
    %1094 = vmatprep.subr.mxu0 0.0
    %1095 = vmatpush2.msra.mxu0 0.0
    %1096 = vmatprep.subr.mxu0 0.0
    %1097 = vmatpush2.msra.mxu0 0.0
    %1098 = vmatprep.subr.mxu0 0.0
    %1099 = vmatpush2.msra.mxu0 0.0
    %1100 = vmatprep.subr.mxu0 0.0
    %1101 = vmatpush2.msra.mxu0 0.0
    %1102 = vmatprep.subr.mxu0 0.0
    %1103 = vmatpush2.msra.mxu0 0.0
    %1104 = vmatprep.subr.mxu0 0.0
    %1105 = vmatpush2.msra.mxu0 0.0
    %1106 = vmatprep.mubr.f32.mxu0 0.0
    %1107 = vmatmul.mubr.f32.gmra.mxu0 %v999
    %v1108 = vpop.f32.mrf.mxu0
    %v1109 = vadd.f32 %v1040, %v1108
    %v1110 = vpop.f32.mrf.mxu0
    %1111 = vmatprep.mubr.f32.mxu0 0.0
    %1112 = vmatmul.mubr.f32.gmra.mxu0 %v1002
    %v1113 = vpop.f32.mrf.mxu0
    %v1114 = vadd.f32 %v1040, %v1113
    %v1115 = vpop.f32.mrf.mxu0
    %1116 = vdwg.mxu0
    %1117 = vmatprep.subr.mxu0 0.0
    %1118 = vmatpush1.msra.mxu0 %v1034
    %1119 = vmatprep.subr.mxu0 0.0
    %1120 = vmatpush1.msra.mxu0 %v1033
    %1121 = vmatprep.subr.mxu0 0.0
    %1122 = vmatpush1.msra.mxu0 %v1032
    %1123 = vmatprep.subr.mxu0 0.0
    %1124 = vmatpush1.msra.mxu0 %v1031
    %1125 = vmatprep.subr.mxu0 0.0
    %1126 = vmatpush1.msra.mxu0 %v1030
    %1127 = vmatprep.subr.mxu0 0.0
    %1128 = vmatpush1.msra.mxu0 %v1029
    %1129 = vmatprep.subr.mxu0 0.0
    %1130 = vmatpush1.msra.mxu0 %v1028
    %1131 = vmatprep.subr.mxu0 0.0
    %1132 = vmatpush1.msra.mxu0 %v1027
    %1133 = vmatprep.subr.mxu0 0.0
    %1134 = vmatpush1.msra.mxu0 %v1026
    %1135 = vmatprep.subr.mxu0 0.0
    %1136 = vmatpush1.msra.mxu0 %v1025
    %1137 = vmatprep.subr.mxu0 0.0
    %1138 = vmatpush1.msra.mxu0 %v1024
    %1139 = vmatprep.subr.mxu0 0.0
    %1140 = vmatpush1.msra.mxu0 %v1023
    %1141 = vmatprep.subr.mxu0 0.0
    %1142 = vmatpush1.msra.mxu0 %v1022
    %1143 = vmatprep.subr.mxu0 0.0
    %1144 = vmatpush1.msra.mxu0 %v1021
    %1145 = vmatprep.subr.mxu0 0.0
    %1146 = vmatpush1.msra.mxu0 %v1020
    %1147 = vmatprep.subr.mxu0 0.0
    %1148 = vmatpush1.msra.mxu0 %v1019
    %1149 = vmatprep.subr.mxu0 0.0
    %1150 = vmatpush2.msra.mxu0 0.0
    %1151 = vmatprep.subr.mxu0 0.0
    %1152 = vmatpush2.msra.mxu0 0.0
    %1153 = vmatprep.subr.mxu0 0.0
    %1154 = vmatpush2.msra.mxu0 0.0
    %1155 = vmatprep.subr.mxu0 0.0
    %1156 = vmatpush2.msra.mxu0 0.0
    %1157 = vmatprep.subr.mxu0 0.0
    %1158 = vmatpush2.msra.mxu0 0.0
    %1159 = vmatprep.subr.mxu0 0.0
    %1160 = vmatpush2.msra.mxu0 0.0
    %1161 = vmatprep.subr.mxu0 0.0
    %1162 = vmatpush2.msra.mxu0 0.0
    %1163 = vmatprep.subr.mxu0 0.0
    %1164 = vmatpush2.msra.mxu0 0.0
    %1165 = vmatprep.subr.mxu0 0.0
    %1166 = vmatpush2.msra.mxu0 0.0
    %1167 = vmatprep.subr.mxu0 0.0
    %1168 = vmatpush2.msra.mxu0 0.0
    %1169 = vmatprep.subr.mxu0 0.0
    %1170 = vmatpush2.msra.mxu0 0.0
    %1171 = vmatprep.subr.mxu0 0.0
    %1172 = vmatpush2.msra.mxu0 0.0
    %1173 = vmatprep.subr.mxu0 0.0
    %1174 = vmatpush2.msra.mxu0 0.0
    %1175 = vmatprep.subr.mxu0 0.0
    %1176 = vmatpush2.msra.mxu0 0.0
    %1177 = vmatprep.subr.mxu0 0.0
    %1178 = vmatpush2.msra.mxu0 0.0
    %1179 = vmatprep.subr.mxu0 0.0
    %1180 = vmatpush2.msra.mxu0 0.0
    %1181 = vmatprep.mubr.f32.mxu0 0.0
    %1182 = vmatmul.mubr.f32.gmra.mxu0 0.0
    %v1183 = vpop.f32.mrf.mxu0
    %v1184 = vadd.f32 0.0, %v1183
    %v1185 = vpop.f32.mrf.mxu0
    %1186 = vdwg.mxu0
    %v1187 = vadd.f32 %v1109, %v1184
    %v1188 = vtanh.pop %v1187
    %v1189 = vmul.f32 %v1188, %v93
    %v1190 = vadd.f32 %v1189, %v94
    %1191 = vrot.lane.b32.xlu0 %v1190, 64
    %v1192 = vpop.permute.xlu0 %1191
    %v1193 = vmul.f32 %v1190, %v1192
    %1194 = vrot.lane.b32.xlu0 %v1193, 32
    %v1195 = vpop.permute.xlu0 %1194
    %v1196 = vmul.f32 %v1190, 0.0
    %v1197 = vadd.f32 %v1195, %v1196
    %v1198 = vtanh.pop %v1197
    %v1199 = vmul.f32 %v1192, %v1198
    %1200 = vmatprep.subr.mxu0 0.0
    %1201 = vmatpush1.msra.mxu0 %v1034
    %1202 = vmatprep.subr.mxu0 0.0
    %1203 = vmatpush1.msra.mxu0 %v1033
    %1204 = vmatprep.subr.mxu0 0.0
    %1205 = vmatpush1.msra.mxu0 %v1032
    %1206 = vmatprep.subr.mxu0 0.0
    %1207 = vmatpush1.msra.mxu0 %v1031
    %1208 = vmatprep.subr.mxu0 0.0
    %1209 = vmatpush1.msra.mxu0 %v1030
    %1210 = vmatprep.subr.mxu0 0.0
    %1211 = vmatpush1.msra.mxu0 %v1029
    %1212 = vmatprep.subr.mxu0 0.0
    %1213 = vmatpush1.msra.mxu0 %v1028
    %1214 = vmatprep.subr.mxu0 0.0
    %1215 = vmatpush1.msra.mxu0 %v1027
    %1216 = vmatprep.subr.mxu0 0.0
    %1217 = vmatpush1.msra.mxu0 %v1026
    %1218 = vmatprep.subr.mxu0 0.0
    %1219 = vmatpush1.msra.mxu0 %v1025
    %1220 = vmatprep.subr.mxu0 0.0
    %1221 = vmatpush1.msra.mxu0 %v1024
    %1222 = vmatprep.subr.mxu0 0.0
    %1223 = vmatpush1.msra.mxu0 %v1023
    %1224 = vmatprep.subr.mxu0 0.0
    %1225 = vmatpush1.msra.mxu0 %v1022
    %1226 = vmatprep.subr.mxu0 0.0
    %1227 = vmatpush1.msra.mxu0 %v1021
    %1228 = vmatprep.subr.mxu0 0.0
    %1229 = vmatpush1.msra.mxu0 %v1020
    %1230 = vmatprep.subr.mxu0 0.0
    %1231 = vmatpush1.msra.mxu0 %v1019
    %1232 = vmatprep.subr.mxu0 0.0
    %1233 = vmatpush2.msra.mxu0 0.0
    %1234 = vmatprep.subr.mxu0 0.0
    %1235 = vmatpush2.msra.mxu0 0.0
    %1236 = vmatprep.subr.mxu0 0.0
    %1237 = vmatpush2.msra.mxu0 0.0
    %1238 = vmatprep.subr.mxu0 0.0
    %1239 = vmatpush2.msra.mxu0 0.0
    %1240 = vmatprep.subr.mxu0 0.0
    %1241 = vmatpush2.msra.mxu0 0.0
    %1242 = vmatprep.subr.mxu0 0.0
    %1243 = vmatpush2.msra.mxu0 0.0
    %1244 = vmatprep.subr.mxu0 0.0
    %1245 = vmatpush2.msra.mxu0 0.0
    %1246 = vmatprep.subr.mxu0 0.0
    %1247 = vmatpush2.msra.mxu0 0.0
    %1248 = vmatprep.subr.mxu0 0.0
    %1249 = vmatpush2.msra.mxu0 0.0
    %1250 = vmatprep.subr.mxu0 0.0
    %1251 = vmatpush2.msra.mxu0 0.0
    %1252 = vmatprep.subr.mxu0 0.0
    %1253 = vmatpush2.msra.mxu0 0.0
    %1254 = vmatprep.subr.mxu0 0.0
    %1255 = vmatpush2.msra.mxu0 0.0
    %1256 = vmatprep.subr.mxu0 0.0
    %1257 = vmatpush2.msra.mxu0 0.0
    %1258 = vmatprep.subr.mxu0 0.0
    %1259 = vmatpush2.msra.mxu0 0.0
    %1260 = vmatprep.subr.mxu0 0.0
    %1261 = vmatpush2.msra.mxu0 0.0
    %1262 = vmatprep.subr.mxu0 0.0
    %1263 = vmatpush2.msra.mxu0 0.0
    %1264 = vmatprep.mubr.f32.mxu0 0.0
    %1265 = vmatmul.mubr.f32.gmra.mxu0 %v1199
    %v1266 = vpop.f32.mrf.mxu0
    %v1267 = vadd.f32 0.0, %v1266
    %v1268 = vpop.f32.mrf.mxu0
    %1269 = vdwg.mxu0
    %v1271 = vrot.slane %v1267, 6
    %v1273 = vadd.f32 %v1109, %v1271
    %v1274 = vtanh.pop %v1273
    %v1275 = vmul.f32 %v1274, %v93
    %v1276 = vadd.f32 %v1275, %v94
    %v1278 = vrot.slane %v1276, 2
    %1280 = vrot.lane.b32.xlu0 %v1278, 64
    %v1281 = vpop.permute.xlu0 %1280
    %v1283 = vrot.slane %v1281, 6
    %v1285 = vmul.f32 %v1276, %v1283
    %v1287 = vrot.slane %v1285, 2
    %1289 = vrot.lane.b32.xlu0 %v1287, 32
    %v1290 = vpop.permute.xlu0 %1289
    %v1292 = vrot.slane %v1197, 6
    %v1294 = vmul.f32 %v1276, %v1292
    %v1296 = vrot.slane %v1294, 2
    %v1298 = vadd.f32 %v1290, %v1296
    %v1299 = vtanh.pop %v1298
    %v1300 = vmul.f32 %v1281, %v1299
    %1301 = vmatprep.subr.mxu0 0.0
    %1302 = vmatpush1.msra.mxu0 %v1034
    %1303 = vmatprep.subr.mxu0 0.0
    %1304 = vmatpush1.msra.mxu0 %v1033
    %1305 = vmatprep.subr.mxu0 0.0
    %1306 = vmatpush1.msra.mxu0 %v1032
    %1307 = vmatprep.subr.mxu0 0.0
    %1308 = vmatpush1.msra.mxu0 %v1031
    %1309 = vmatprep.subr.mxu0 0.0
    %1310 = vmatpush1.msra.mxu0 %v1030
    %1311 = vmatprep.subr.mxu0 0.0
    %1312 = vmatpush1.msra.mxu0 %v1029
    %1313 = vmatprep.subr.mxu0 0.0
    %1314 = vmatpush1.msra.mxu0 %v1028
    %1315 = vmatprep.subr.mxu0 0.0
    %1316 = vmatpush1.msra.mxu0 %v1027
    %1317 = vmatprep.subr.mxu0 0.0
    %1318 = vmatpush1.msra.mxu0 %v1026
    %1319 = vmatprep.subr.mxu0 0.0
    %1320 = vmatpush1.msra.mxu0 %v1025
    %1321 = vmatprep.subr.mxu0 0.0
    %1322 = vmatpush1.msra.mxu0 %v1024
    %1323 = vmatprep.subr.mxu0 0.0
    %1324 = vmatpush1.msra.mxu0 %v1023
    %1325 = vmatprep.subr.mxu0 0.0
    %1326 = vmatpush1.msra.mxu0 %v1022
    %1327 = vmatprep.subr.mxu0 0.0
    %1328 = vmatpush1.msra.mxu0 %v1021
    %1329 = vmatprep.subr.mxu0 0.0
    %1330 = vmatpush1.msra.mxu0 %v1020
    %1331 = vmatprep.subr.mxu0 0.0
    %1332 = vmatpush1.msra.mxu0 %v1019
    %1333 = vmatprep.subr.mxu0 0.0
    %1334 = vmatpush2.msra.mxu0 0.0
    %1335 = vmatprep.subr.mxu0 0.0
    %1336 = vmatpush2.msra.mxu0 0.0
    %1337 = vmatprep.subr.mxu0 0.0
    %1338 = vmatpush2.msra.mxu0 0.0
    %1339 = vmatprep.subr.mxu0 0.0
    %1340 = vmatpush2.msra.mxu0 0.0
    %1341 = vmatprep.subr.mxu0 0.0
    %1342 = vmatpush2.msra.mxu0 0.0
    %1343 = vmatprep.subr.mxu0 0.0
    %1344 = vmatpush2.msra.mxu0 0.0
    %1345 = vmatprep.subr.mxu0 0.0
    %1346 = vmatpush2.msra.mxu0 0.0
    %1347 = vmatprep.subr.mxu0 0.0
    %1348 = vmatpush2.msra.mxu0 0.0
    %1349 = vmatprep.subr.mxu0 0.0
    %1350 = vmatpush2.msra.mxu0 0.0
    %1351 = vmatprep.subr.mxu0 0.0
    %1352 = vmatpush2.msra.mxu0 0.0
    %1353 = vmatprep.subr.mxu0 0.0
    %1354 = vmatpush2.msra.mxu0 0.0
    %1355 = vmatprep.subr.mxu0 0.0
    %1356 = vmatpush2.msra.mxu0 0.0
    %1357 = vmatprep.subr.mxu0 0.0
    %1358 = vmatpush2.msra.mxu0 0.0
    %1359 = vmatprep.subr.mxu0 0.0
    %1360 = vmatpush2.msra.mxu0 0.0
    %1361 = vmatprep.subr.mxu0 0.0
    %1362 = vmatpush2.msra.mxu0 0.0
    %1363 = vmatprep.subr.mxu0 0.0
    %1364 = vmatpush2.msra.mxu0 0.0
    %1365 = vmatprep.mubr.f32.mxu0 0.0
    %1366 = vmatmul.mubr.f32.gmra.mxu0 %v1300
    %v1367 = vpop.f32.mrf.mxu0
    %v1368 = vadd.f32 0.0, %v1367
    %v1369 = vpop.f32.mrf.mxu0
    %1370 = vdwg.mxu0
    %v1372 = vrot.slane %v1368, 4
    %v1374 = vadd.f32 %v1109, %v1372
    %v1375 = vtanh.pop %v1374
    %v1376 = vmul.f32 %v1375, %v93
    %v1377 = vadd.f32 %v1376, %v94
    %v1379 = vrot.slane %v1377, 4
    %1381 = vrot.lane.b32.xlu0 %v1379, 64
    %v1382 = vpop.permute.xlu0 %1381
    %v1384 = vrot.slane %v1382, 4
    %v1386 = vmul.f32 %v1377, %v1384
    %v1388 = vrot.slane %v1386, 4
    %1390 = vrot.lane.b32.xlu0 %v1388, 32
    %v1391 = vpop.permute.xlu0 %1390
    %v1393 = vrot.slane %v1298, 4
    %v1395 = vmul.f32 %v1377, %v1393
    %v1397 = vrot.slane %v1395, 4
    %v1399 = vadd.f32 %v1391, %v1397
    %v1400 = vtanh.pop %v1399
    %v1401 = vmul.f32 %v1382, %v1400
    %1402 = vmatprep.subr.mxu0 0.0
    %1403 = vmatpush1.msra.mxu0 %v1034
    %1404 = vmatprep.subr.mxu0 0.0
    %1405 = vmatpush1.msra.mxu0 %v1033
    %1406 = vmatprep.subr.mxu0 0.0
    %1407 = vmatpush1.msra.mxu0 %v1032
    %1408 = vmatprep.subr.mxu0 0.0
    %1409 = vmatpush1.msra.mxu0 %v1031
    %1410 = vmatprep.subr.mxu0 0.0
    %1411 = vmatpush1.msra.mxu0 %v1030
    %1412 = vmatprep.subr.mxu0 0.0
    %1413 = vmatpush1.msra.mxu0 %v1029
    %1414 = vmatprep.subr.mxu0 0.0
    %1415 = vmatpush1.msra.mxu0 %v1028
    %1416 = vmatprep.subr.mxu0 0.0
    %1417 = vmatpush1.msra.mxu0 %v1027
    %1418 = vmatprep.subr.mxu0 0.0
    %1419 = vmatpush1.msra.mxu0 %v1026
    %1420 = vmatprep.subr.mxu0 0.0
    %1421 = vmatpush1.msra.mxu0 %v1025
    %1422 = vmatprep.subr.mxu0 0.0
    %1423 = vmatpush1.msra.mxu0 %v1024
    %1424 = vmatprep.subr.mxu0 0.0
    %1425 = vmatpush1.msra.mxu0 %v1023
    %1426 = vmatprep.subr.mxu0 0.0
    %1427 = vmatpush1.msra.mxu0 %v1022
    %1428 = vmatprep.subr.mxu0 0.0
    %1429 = vmatpush1.msra.mxu0 %v1021
    %1430 = vmatprep.subr.mxu0 0.0
    %1431 = vmatpush1.msra.mxu0 %v1020
    %1432 = vmatprep.subr.mxu0 0.0
    %1433 = vmatpush1.msra.mxu0 %v1019
    %1434 = vmatprep.subr.mxu0 0.0
    %1435 = vmatpush2.msra.mxu0 0.0
    %1436 = vmatprep.subr.mxu0 0.0
    %1437 = vmatpush2.msra.mxu0 0.0
    %1438 = vmatprep.subr.mxu0 0.0
    %1439 = vmatpush2.msra.mxu0 0.0
    %1440 = vmatprep.subr.mxu0 0.0
    %1441 = vmatpush2.msra.mxu0 0.0
    %1442 = vmatprep.subr.mxu0 0.0
    %1443 = vmatpush2.msra.mxu0 0.0
    %1444 = vmatprep.subr.mxu0 0.0
    %1445 = vmatpush2.msra.mxu0 0.0
    %1446 = vmatprep.subr.mxu0 0.0
    %1447 = vmatpush2.msra.mxu0 0.0
    %1448 = vmatprep.subr.mxu0 0.0
    %1449 = vmatpush2.msra.mxu0 0.0
    %1450 = vmatprep.subr.mxu0 0.0
    %1451 = vmatpush2.msra.mxu0 0.0
    %1452 = vmatprep.subr.mxu0 0.0
    %1453 = vmatpush2.msra.mxu0 0.0
    %1454 = vmatprep.subr.mxu0 0.0
    %1455 = vmatpush2.msra.mxu0 0.0
    %1456 = vmatprep.subr.mxu0 0.0
    %1457 = vmatpush2.msra.mxu0 0.0
    %1458 = vmatprep.subr.mxu0 0.0
    %1459 = vmatpush2.msra.mxu0 0.0
    %1460 = vmatprep.subr.mxu0 0.0
    %1461 = vmatpush2.msra.mxu0 0.0
    %1462 = vmatprep.subr.mxu0 0.0
    %1463 = vmatpush2.msra.mxu0 0.0
    %1464 = vmatprep.subr.mxu0 0.0
    %1465 = vmatpush2.msra.mxu0 0.0
    %1466 = vmatprep.mubr.f32.mxu0 0.0
    %1467 = vmatmul.mubr.f32.gmra.mxu0 %v1401
    %v1468 = vpop.f32.mrf.mxu0
    %v1469 = vadd.f32 0.0, %v1468
    %v1470 = vpop.f32.mrf.mxu0
    %1471 = vdwg.mxu0
    %v1473 = vrot.slane %v1469, 2
    %v1475 = vadd.f32 %v1109, %v1473
    %v1476 = vtanh.pop %v1475
    %v1477 = vmul.f32 %v1476, %v93
    %v1478 = vadd.f32 %v1477, %v94
    %v1480 = vrot.slane %v1478, 6
    %1482 = vrot.lane.b32.xlu0 %v1480, 64
    %v1483 = vpop.permute.xlu0 %1482
    %v1485 = vrot.slane %v1483, 2
    %v1487 = vmul.f32 %v1478, %v1485
    %v1489 = vrot.slane %v1487, 6
    %1491 = vrot.lane.b32.xlu0 %v1489, 32
    %v1492 = vpop.permute.xlu0 %1491
    %v1494 = vrot.slane %v1399, 2
    %v1496 = vmul.f32 %v1478, %v1494
    %v1498 = vrot.slane %v1496, 6
    %v1500 = vadd.f32 %v1492, %v1498
    %v1501 = vtanh.pop %v1500
    %v1502 = vmul.f32 %v1483, %v1501
    %1503 = vmatprep.subr.mxu0 0.0
    %1504 = vmatpush1.msra.mxu0 %v1034
    %1505 = vmatprep.subr.mxu0 0.0
    %1506 = vmatpush1.msra.mxu0 %v1033
    %1507 = vmatprep.subr.mxu0 0.0
    %1508 = vmatpush1.msra.mxu0 %v1032
    %1509 = vmatprep.subr.mxu0 0.0
    %1510 = vmatpush1.msra.mxu0 %v1031
    %1511 = vmatprep.subr.mxu0 0.0
    %1512 = vmatpush1.msra.mxu0 %v1030
    %1513 = vmatprep.subr.mxu0 0.0
    %1514 = vmatpush1.msra.mxu0 %v1029
    %1515 = vmatprep.subr.mxu0 0.0
    %1516 = vmatpush1.msra.mxu0 %v1028
    %1517 = vmatprep.subr.mxu0 0.0
    %1518 = vmatpush1.msra.mxu0 %v1027
    %1519 = vmatprep.subr.mxu0 0.0
    %1520 = vmatpush1.msra.mxu0 %v1026
    %1521 = vmatprep.subr.mxu0 0.0
    %1522 = vmatpush1.msra.mxu0 %v1025
    %1523 = vmatprep.subr.mxu0 0.0
    %1524 = vmatpush1.msra.mxu0 %v1024
    %1525 = vmatprep.subr.mxu0 0.0
    %1526 = vmatpush1.msra.mxu0 %v1023
    %1527 = vmatprep.subr.mxu0 0.0
    %1528 = vmatpush1.msra.mxu0 %v1022
    %1529 = vmatprep.subr.mxu0 0.0
    %1530 = vmatpush1.msra.mxu0 %v1021
    %1531 = vmatprep.subr.mxu0 0.0
    %1532 = vmatpush1.msra.mxu0 %v1020
    %1533 = vmatprep.subr.mxu0 0.0
    %1534 = vmatpush1.msra.mxu0 %v1019
    %1535 = vmatprep.subr.mxu0 0.0
    %1536 = vmatpush2.msra.mxu0 0.0
    %1537 = vmatprep.subr.mxu0 0.0
    %1538 = vmatpush2.msra.mxu0 0.0
    %1539 = vmatprep.subr.mxu0 0.0
    %1540 = vmatpush2.msra.mxu0 0.0
    %1541 = vmatprep.subr.mxu0 0.0
    %1542 = vmatpush2.msra.mxu0 0.0
    %1543 = vmatprep.subr.mxu0 0.0
    %1544 = vmatpush2.msra.mxu0 0.0
    %1545 = vmatprep.subr.mxu0 0.0
    %1546 = vmatpush2.msra.mxu0 0.0
    %1547 = vmatprep.subr.mxu0 0.0
    %1548 = vmatpush2.msra.mxu0 0.0
    %1549 = vmatprep.subr.mxu0 0.0
    %1550 = vmatpush2.msra.mxu0 0.0
    %1551 = vmatprep.subr.mxu0 0.0
    %1552 = vmatpush2.msra.mxu0 0.0
    %1553 = vmatprep.subr.mxu0 0.0
    %1554 = vmatpush2.msra.mxu0 0.0
    %1555 = vmatprep.subr.mxu0 0.0
    %1556 = vmatpush2.msra.mxu0 0.0
    %1557 = vmatprep.subr.mxu0 0.0
    %1558 = vmatpush2.msra.mxu0 0.0
    %1559 = vmatprep.subr.mxu0 0.0
    %1560 = vmatpush2.msra.mxu0 0.0
    %1561 = vmatprep.subr.mxu0 0.0
    %1562 = vmatpush2.msra.mxu0 0.0
    %1563 = vmatprep.subr.mxu0 0.0
    %1564 = vmatpush2.msra.mxu0 0.0
    %1565 = vmatprep.subr.mxu0 0.0
    %1566 = vmatpush2.msra.mxu0 0.0
    %1567 = vmatprep.mubr.f32.mxu0 0.0
    %1568 = vmatmul.mubr.f32.gmra.mxu0 %v1502
    %v1569 = vpop.f32.mrf.mxu0
    %v1570 = vadd.f32 0.0, %v1569
    %v1571 = vpop.f32.mrf.mxu0
    %1572 = vdwg.mxu0
    %v1573 = vadd.f32 %v1114, %v1570
    %v1574 = vtanh.pop %v1573
    %v1575 = vmul.f32 %v1574, %v93
    %v1576 = vadd.f32 %v1575, %v94
    %1577 = vrot.lane.b32.xlu0 %v1576, 64
    %v1578 = vpop.permute.xlu0 %1577
    %v1579 = vmul.f32 %v1576, %v1578
    %1580 = vrot.lane.b32.xlu0 %v1579, 32
    %v1581 = vpop.permute.xlu0 %1580
    %v1582 = vmul.f32 %v1576, %v1500
    %v1583 = vadd.f32 %v1581, %v1582
    %v1584 = vtanh.pop %v1583
    %v1585 = vmul.f32 %v1578, %v1584
    %1586 = vmatprep.subr.mxu0 0.0
    %1587 = vmatpush1.msra.mxu0 %v1034
    %1588 = vmatprep.subr.mxu0 0.0
    %1589 = vmatpush1.msra.mxu0 %v1033
    %1590 = vmatprep.subr.mxu0 0.0
    %1591 = vmatpush1.msra.mxu0 %v1032
    %1592 = vmatprep.subr.mxu0 0.0
    %1593 = vmatpush1.msra.mxu0 %v1031
    %1594 = vmatprep.subr.mxu0 0.0
    %1595 = vmatpush1.msra.mxu0 %v1030
    %1596 = vmatprep.subr.mxu0 0.0
    %1597 = vmatpush1.msra.mxu0 %v1029
    %1598 = vmatprep.subr.mxu0 0.0
    %1599 = vmatpush1.msra.mxu0 %v1028
    %1600 = vmatprep.subr.mxu0 0.0
    %1601 = vmatpush1.msra.mxu0 %v1027
    %1602 = vmatprep.subr.mxu0 0.0
    %1603 = vmatpush1.msra.mxu0 %v1026
    %1604 = vmatprep.subr.mxu0 0.0
    %1605 = vmatpush1.msra.mxu0 %v1025
    %1606 = vmatprep.subr.mxu0 0.0
    %1607 = vmatpush1.msra.mxu0 %v1024
    %1608 = vmatprep.subr.mxu0 0.0
    %1609 = vmatpush1.msra.mxu0 %v1023
    %1610 = vmatprep.subr.mxu0 0.0
    %1611 = vmatpush1.msra.mxu0 %v1022
    %1612 = vmatprep.subr.mxu0 0.0
    %1613 = vmatpush1.msra.mxu0 %v1021
    %1614 = vmatprep.subr.mxu0 0.0
    %1615 = vmatpush1.msra.mxu0 %v1020
    %1616 = vmatprep.subr.mxu0 0.0
    %1617 = vmatpush1.msra.mxu0 %v1019
    %1618 = vmatprep.subr.mxu0 0.0
    %1619 = vmatpush2.msra.mxu0 0.0
    %1620 = vmatprep.subr.mxu0 0.0
    %1621 = vmatpush2.msra.mxu0 0.0
    %1622 = vmatprep.subr.mxu0 0.0
    %1623 = vmatpush2.msra.mxu0 0.0
    %1624 = vmatprep.subr.mxu0 0.0
    %1625 = vmatpush2.msra.mxu0 0.0
    %1626 = vmatprep.subr.mxu0 0.0
    %1627 = vmatpush2.msra.mxu0 0.0
    %1628 = vmatprep.subr.mxu0 0.0
    %1629 = vmatpush2.msra.mxu0 0.0
    %1630 = vmatprep.subr.mxu0 0.0
    %1631 = vmatpush2.msra.mxu0 0.0
    %1632 = vmatprep.subr.mxu0 0.0
    %1633 = vmatpush2.msra.mxu0 0.0
    %1634 = vmatprep.subr.mxu0 0.0
    %1635 = vmatpush2.msra.mxu0 0.0
    %1636 = vmatprep.subr.mxu0 0.0
    %1637 = vmatpush2.msra.mxu0 0.0
    %1638 = vmatprep.subr.mxu0 0.0
    %1639 = vmatpush2.msra.mxu0 0.0
    %1640 = vmatprep.subr.mxu0 0.0
    %1641 = vmatpush2.msra.mxu0 0.0
    %1642 = vmatprep.subr.mxu0 0.0
    %1643 = vmatpush2.msra.mxu0 0.0
    %1644 = vmatprep.subr.mxu0 0.0
    %1645 = vmatpush2.msra.mxu0 0.0
    %1646 = vmatprep.subr.mxu0 0.0
    %1647 = vmatpush2.msra.mxu0 0.0
    %1648 = vmatprep.subr.mxu0 0.0
    %1649 = vmatpush2.msra.mxu0 0.0
    %1650 = vmatprep.mubr.f32.mxu0 0.0
    %1651 = vmatmul.mubr.f32.gmra.mxu0 %v1585
    %v1652 = vpop.f32.mrf.mxu0
    %v1653 = vadd.f32 0.0, %v1652
    %v1654 = vpop.f32.mrf.mxu0
    %1655 = vdwg.mxu0
    %v1657 = vrot.slane %v1653, 6
    %v1659 = vadd.f32 %v1114, %v1657
    %v1660 = vtanh.pop %v1659
    %v1661 = vmul.f32 %v1660, %v93
    %v1662 = vadd.f32 %v1661, %v94
    %v1664 = vrot.slane %v1662, 2
    %1666 = vrot.lane.b32.xlu0 %v1664, 64
    %v1667 = vpop.permute.xlu0 %1666
    %v1669 = vrot.slane %v1667, 6
    %v1671 = vmul.f32 %v1662, %v1669
    %v1673 = vrot.slane %v1671, 2
    %1675 = vrot.lane.b32.xlu0 %v1673, 32
    %v1676 = vpop.permute.xlu0 %1675
    %v1678 = vrot.slane %v1583, 6
    %v1680 = vmul.f32 %v1662, %v1678
    %v1682 = vrot.slane %v1680, 2
    %v1684 = vadd.f32 %v1676, %v1682
    %v1685 = vtanh.pop %v1684
    %v1686 = vmul.f32 %v1667, %v1685
    %1687 = vmatprep.subr.mxu0 0.0
    %1688 = vmatpush1.msra.mxu0 %v1034
    %1689 = vmatprep.subr.mxu0 0.0
    %1690 = vmatpush1.msra.mxu0 %v1033
    %1691 = vmatprep.subr.mxu0 0.0
    %1692 = vmatpush1.msra.mxu0 %v1032
    %1693 = vmatprep.subr.mxu0 0.0
    %1694 = vmatpush1.msra.mxu0 %v1031
    %1695 = vmatprep.subr.mxu0 0.0
    %1696 = vmatpush1.msra.mxu0 %v1030
    %1697 = vmatprep.subr.mxu0 0.0
    %1698 = vmatpush1.msra.mxu0 %v1029
    %1699 = vmatprep.subr.mxu0 0.0
    %1700 = vmatpush1.msra.mxu0 %v1028
    %1701 = vmatprep.subr.mxu0 0.0
    %1702 = vmatpush1.msra.mxu0 %v1027
    %1703 = vmatprep.subr.mxu0 0.0
    %1704 = vmatpush1.msra.mxu0 %v1026
    %1705 = vmatprep.subr.mxu0 0.0
    %1706 = vmatpush1.msra.mxu0 %v1025
    %1707 = vmatprep.subr.mxu0 0.0
    %1708 = vmatpush1.msra.mxu0 %v1024
    %1709 = vmatprep.subr.mxu0 0.0
    %1710 = vmatpush1.msra.mxu0 %v1023
    %1711 = vmatprep.subr.mxu0 0.0
    %1712 = vmatpush1.msra.mxu0 %v1022
    %1713 = vmatprep.subr.mxu0 0.0
    %1714 = vmatpush1.msra.mxu0 %v1021
    %1715 = vmatprep.subr.mxu0 0.0
    %1716 = vmatpush1.msra.mxu0 %v1020
    %1717 = vmatprep.subr.mxu0 0.0
    %1718 = vmatpush1.msra.mxu0 %v1019
    %1719 = vmatprep.subr.mxu0 0.0
    %1720 = vmatpush2.msra.mxu0 0.0
    %1721 = vmatprep.subr.mxu0 0.0
    %1722 = vmatpush2.msra.mxu0 0.0
    %1723 = vmatprep.subr.mxu0 0.0
    %1724 = vmatpush2.msra.mxu0 0.0
    %1725 = vmatprep.subr.mxu0 0.0
    %1726 = vmatpush2.msra.mxu0 0.0
    %1727 = vmatprep.subr.mxu0 0.0
    %1728 = vmatpush2.msra.mxu0 0.0
    %1729 = vmatprep.subr.mxu0 0.0
    %1730 = vmatpush2.msra.mxu0 0.0
    %1731 = vmatprep.subr.mxu0 0.0
    %1732 = vmatpush2.msra.mxu0 0.0
    %1733 = vmatprep.subr.mxu0 0.0
    %1734 = vmatpush2.msra.mxu0 0.0
    %1735 = vmatprep.subr.mxu0 0.0
    %1736 = vmatpush2.msra.mxu0 0.0
    %1737 = vmatprep.subr.mxu0 0.0
    %1738 = vmatpush2.msra.mxu0 0.0
    %1739 = vmatprep.subr.mxu0 0.0
    %1740 = vmatpush2.msra.mxu0 0.0
    %1741 = vmatprep.subr.mxu0 0.0
    %1742 = vmatpush2.msra.mxu0 0.0
    %1743 = vmatprep.subr.mxu0 0.0
    %1744 = vmatpush2.msra.mxu0 0.0
    %1745 = vmatprep.subr.mxu0 0.0
    %1746 = vmatpush2.msra.mxu0 0.0
    %1747 = vmatprep.subr.mxu0 0.0
    %1748 = vmatpush2.msra.mxu0 0.0
    %1749 = vmatprep.subr.mxu0 0.0
    %1750 = vmatpush2.msra.mxu0 0.0
    %1751 = vmatprep.mubr.f32.mxu0 0.0
    %1752 = vmatmul.mubr.f32.gmra.mxu0 %v1686
    %v1753 = vpop.f32.mrf.mxu0
    %v1754 = vadd.f32 0.0, %v1753
    %v1755 = vpop.f32.mrf.mxu0
    %1756 = vdwg.mxu0
    %v1758 = vrot.slane %v1754, 4
    %v1760 = vadd.f32 %v1114, %v1758
    %v1761 = vtanh.pop %v1760
    %v1762 = vmul.f32 %v1761, %v93
    %v1763 = vadd.f32 %v1762, %v94
    %v1765 = vrot.slane %v1763, 4
    %1767 = vrot.lane.b32.xlu0 %v1765, 64
    %v1768 = vpop.permute.xlu0 %1767
    %v1770 = vrot.slane %v1768, 4
    %v1772 = vmul.f32 %v1763, %v1770
    %v1774 = vrot.slane %v1772, 4
    %1776 = vrot.lane.b32.xlu0 %v1774, 32
    %v1777 = vpop.permute.xlu0 %1776
    %v1779 = vrot.slane %v1684, 4
    %v1781 = vmul.f32 %v1763, %v1779
    %v1783 = vrot.slane %v1781, 4
    %v1785 = vadd.f32 %v1777, %v1783
    %v1786 = vtanh.pop %v1785
    %v1787 = vmul.f32 %v1768, %v1786
    %1788 = vmatprep.subr.mxu0 0.0
    %1789 = vmatpush1.msra.mxu0 %v1034
    %1790 = vmatprep.subr.mxu0 0.0
    %1791 = vmatpush1.msra.mxu0 %v1033
    %1792 = vmatprep.subr.mxu0 0.0
    %1793 = vmatpush1.msra.mxu0 %v1032
    %1794 = vmatprep.subr.mxu0 0.0
    %1795 = vmatpush1.msra.mxu0 %v1031
    %1796 = vmatprep.subr.mxu0 0.0
    %1797 = vmatpush1.msra.mxu0 %v1030
    %1798 = vmatprep.subr.mxu0 0.0
    %1799 = vmatpush1.msra.mxu0 %v1029
    %1800 = vmatprep.subr.mxu0 0.0
    %1801 = vmatpush1.msra.mxu0 %v1028
    %1802 = vmatprep.subr.mxu0 0.0
    %1803 = vmatpush1.msra.mxu0 %v1027
    %1804 = vmatprep.subr.mxu0 0.0
    %1805 = vmatpush1.msra.mxu0 %v1026
    %1806 = vmatprep.subr.mxu0 0.0
    %1807 = vmatpush1.msra.mxu0 %v1025
    %1808 = vmatprep.subr.mxu0 0.0
    %1809 = vmatpush1.msra.mxu0 %v1024
    %1810 = vmatprep.subr.mxu0 0.0
    %1811 = vmatpush1.msra.mxu0 %v1023
    %1812 = vmatprep.subr.mxu0 0.0
    %1813 = vmatpush1.msra.mxu0 %v1022
    %1814 = vmatprep.subr.mxu0 0.0
    %1815 = vmatpush1.msra.mxu0 %v1021
    %1816 = vmatprep.subr.mxu0 0.0
    %1817 = vmatpush1.msra.mxu0 %v1020
    %1818 = vmatprep.subr.mxu0 0.0
    %1819 = vmatpush1.msra.mxu0 %v1019
    %1820 = vmatprep.subr.mxu0 0.0
    %1821 = vmatpush2.msra.mxu0 0.0
    %1822 = vmatprep.subr.mxu0 0.0
    %1823 = vmatpush2.msra.mxu0 0.0
    %1824 = vmatprep.subr.mxu0 0.0
    %1825 = vmatpush2.msra.mxu0 0.0
    %1826 = vmatprep.subr.mxu0 0.0
    %1827 = vmatpush2.msra.mxu0 0.0
    %1828 = vmatprep.subr.mxu0 0.0
    %1829 = vmatpush2.msra.mxu0 0.0
    %1830 = vmatprep.subr.mxu0 0.0
    %1831 = vmatpush2.msra.mxu0 0.0
    %1832 = vmatprep.subr.mxu0 0.0
    %1833 = vmatpush2.msra.mxu0 0.0
    %1834 = vmatprep.subr.mxu0 0.0
    %1835 = vmatpush2.msra.mxu0 0.0
    %1836 = vmatprep.subr.mxu0 0.0
    %1837 = vmatpush2.msra.mxu0 0.0
    %1838 = vmatprep.subr.mxu0 0.0
    %1839 = vmatpush2.msra.mxu0 0.0
    %1840 = vmatprep.subr.mxu0 0.0
    %1841 = vmatpush2.msra.mxu0 0.0
    %1842 = vmatprep.subr.mxu0 0.0
    %1843 = vmatpush2.msra.mxu0 0.0
    %1844 = vmatprep.subr.mxu0 0.0
    %1845 = vmatpush2.msra.mxu0 0.0
    %1846 = vmatprep.subr.mxu0 0.0
    %1847 = vmatpush2.msra.mxu0 0.0
    %1848 = vmatprep.subr.mxu0 0.0
    %1849 = vmatpush2.msra.mxu0 0.0
    %1850 = vmatprep.subr.mxu0 0.0
    %1851 = vmatpush2.msra.mxu0 0.0
    %1852 = vmatprep.mubr.f32.mxu0 0.0
    %1853 = vmatmul.mubr.f32.gmra.mxu0 %v1787
    %v1854 = vpop.f32.mrf.mxu0
    %v1855 = vadd.f32 0.0, %v1854
    %v1856 = vpop.f32.mrf.mxu0
    %1857 = vdwg.mxu0
    %v1859 = vrot.slane %v1855, 2
    %v1861 = vadd.f32 %v1114, %v1859
    %v1862 = vtanh.pop %v1861
    %v1863 = vmul.f32 %v1862, %v93
    %v1864 = vadd.f32 %v1863, %v94
    %v1866 = vrot.slane %v1864, 6
    %1868 = vrot.lane.b32.xlu0 %v1866, 64
    %v1869 = vpop.permute.xlu0 %1868
    %v1871 = vrot.slane %v1869, 2
    %v1873 = vmul.f32 %v1864, %v1871
    %v1875 = vrot.slane %v1873, 6
    %1877 = vrot.lane.b32.xlu0 %v1875, 32
    %v1878 = vpop.permute.xlu0 %1877
    %v1880 = vrot.slane %v1785, 2
    %v1882 = vmul.f32 %v1864, %v1880
    %v1884 = vrot.slane %v1882, 6
    %v1886 = vadd.f32 %v1878, %v1884
    %v1887 = vtanh.pop %v1886
    %v1888 = vmul.f32 %v1869, %v1887
    %v1889 = vld [vmem:[#allocation8] sm:$0xff]
    %v1890 = vld [vmem:[#allocation8 + $0x8] sm:$0xff]
    %v1891 = vld [vmem:[#allocation8 + $0x10] sm:$0xff]
    %v1892 = vld [vmem:[#allocation8 + $0x18] sm:$0xff]
    %v1893 = vld [vmem:[#allocation8 + $0x20] sm:$0xff]
    %v1894 = vld [vmem:[#allocation8 + $0x28] sm:$0xff]
    %v1895 = vld [vmem:[#allocation8 + $0x30] sm:$0xff]
    %v1896 = vld [vmem:[#allocation8 + $0x38] sm:$0xff]
    %v1897 = vld [vmem:[#allocation8 + $0x40] sm:$0xff]
    %v1898 = vld [vmem:[#allocation8 + $0x48] sm:$0xff]
    %v1899 = vld [vmem:[#allocation8 + $0x50] sm:$0xff]
    %v1900 = vld [vmem:[#allocation8 + $0x58] sm:$0xff]
    %v1901 = vld [vmem:[#allocation8 + $0x60] sm:$0xff]
    %v1902 = vld [vmem:[#allocation8 + $0x68] sm:$0xff]
    %v1903 = vld [vmem:[#allocation8 + $0x70] sm:$0xff]
    %v1904 = vld [vmem:[#allocation8 + $0x78] sm:$0xff]
    %v1905 = vld [vmem:[%s8] sm:$0x1]
    %v1907 = vlaneseq
    %v1908 = vshrl.u32 %v1907, 7
    %v1909 = vsub.s32 0, %v1908
    %v1910 = vrot.slane %v1905, %v1909
    %1912 = vmatprep.subr.mxu0 0.0
    %1913 = vmatpush1.msra.mxu0 %v1904
    %1914 = vmatprep.subr.mxu0 0.0
    %1915 = vmatpush1.msra.mxu0 %v1903
    %1916 = vmatprep.subr.mxu0 0.0
    %1917 = vmatpush1.msra.mxu0 %v1902
    %1918 = vmatprep.subr.mxu0 0.0
    %1919 = vmatpush1.msra.mxu0 %v1901
    %1920 = vmatprep.subr.mxu0 0.0
    %1921 = vmatpush1.msra.mxu0 %v1900
    %1922 = vmatprep.subr.mxu0 0.0
    %1923 = vmatpush1.msra.mxu0 %v1899
    %1924 = vmatprep.subr.mxu0 0.0
    %1925 = vmatpush1.msra.mxu0 %v1898
    %1926 = vmatprep.subr.mxu0 0.0
    %1927 = vmatpush1.msra.mxu0 %v1897
    %1928 = vmatprep.subr.mxu0 0.0
    %1929 = vmatpush1.msra.mxu0 %v1896
    %1930 = vmatprep.subr.mxu0 0.0
    %1931 = vmatpush1.msra.mxu0 %v1895
    %1932 = vmatprep.subr.mxu0 0.0
    %1933 = vmatpush1.msra.mxu0 %v1894
    %1934 = vmatprep.subr.mxu0 0.0
    %1935 = vmatpush1.msra.mxu0 %v1893
    %1936 = vmatprep.subr.mxu0 0.0
    %1937 = vmatpush1.msra.mxu0 %v1892
    %1938 = vmatprep.subr.mxu0 0.0
    %1939 = vmatpush1.msra.mxu0 %v1891
    %1940 = vmatprep.subr.mxu0 0.0
    %1941 = vmatpush1.msra.mxu0 %v1890
    %1942 = vmatprep.subr.mxu0 0.0
    %1943 = vmatpush1.msra.mxu0 %v1889
    %1944 = vmatprep.subr.mxu0 0.0
    %1945 = vmatpush2.msra.mxu0 0.0
    %1946 = vmatprep.subr.mxu0 0.0
    %1947 = vmatpush2.msra.mxu0 0.0
    %1948 = vmatprep.subr.mxu0 0.0
    %1949 = vmatpush2.msra.mxu0 0.0
    %1950 = vmatprep.subr.mxu0 0.0
    %1951 = vmatpush2.msra.mxu0 0.0
    %1952 = vmatprep.subr.mxu0 0.0
    %1953 = vmatpush2.msra.mxu0 0.0
    %1954 = vmatprep.subr.mxu0 0.0
    %1955 = vmatpush2.msra.mxu0 0.0
    %1956 = vmatprep.subr.mxu0 0.0
    %1957 = vmatpush2.msra.mxu0 0.0
    %1958 = vmatprep.subr.mxu0 0.0
    %1959 = vmatpush2.msra.mxu0 0.0
    %1960 = vmatprep.subr.mxu0 0.0
    %1961 = vmatpush2.msra.mxu0 0.0
    %1962 = vmatprep.subr.mxu0 0.0
    %1963 = vmatpush2.msra.mxu0 0.0
    %1964 = vmatprep.subr.mxu0 0.0
    %1965 = vmatpush2.msra.mxu0 0.0
    %1966 = vmatprep.subr.mxu0 0.0
    %1967 = vmatpush2.msra.mxu0 0.0
    %1968 = vmatprep.subr.mxu0 0.0
    %1969 = vmatpush2.msra.mxu0 0.0
    %1970 = vmatprep.subr.mxu0 0.0
    %1971 = vmatpush2.msra.mxu0 0.0
    %1972 = vmatprep.subr.mxu0 0.0
    %1973 = vmatpush2.msra.mxu0 0.0
    %1974 = vmatprep.subr.mxu0 0.0
    %1975 = vmatpush2.msra.mxu0 0.0
    %1976 = vmatprep.mubr.f32.mxu0 0.0
    %1977 = vmatmul.mubr.f32.gmra.mxu0 %v1888
    %v1978 = vpop.f32.mrf.mxu0
    %v1979 = vadd.f32 %v1910, %v1978
    %v1980 = vpop.f32.mrf.mxu0
    %1981 = vdwg.mxu0
    %1982 = vst [vmem:[#allocation10] sm:$0x3] %v1979
    // Predicated region
    $region54: #{lstm_model_forward.1} parent=1 // pred_check
      _
    $region55: #{lstm_model_forward.1} parent=1 // pred_check_branch
      %1984 = sbr.rel (0) target = $region57
    $region56: #{lstm_model_forward.1} parent=1 // pred_region
      %s1986 = ssub.s32 32, 32
      %1987 = vsyncadd [#allocation4], %s1986
      %s1989 = sshll.u32 [#allocation10], 4
      %s1990 = int_to_ptr.vmem [resolvable:$true] %s1989
      %1992 = dma.vmem_to_hbm [thread:$0]  %s1990, 32, %s9, [#allocation4]
    $region57: #{lstm_model_forward.1} parent=1 // pred_fallthru
      _
    // Predicated region
    $region58: #{lstm_model_forward.1} parent=1 // pred_check
      _
    $region59: #{lstm_model_forward.1} parent=1 // pred_check_branch
      %1994 = sbr.rel (0) target = $region61
    $region60: #{lstm_model_forward.1} parent=1 // pred_region
      %1995 = dma.done [#allocation4], 32
    $region61: #{lstm_model_forward.1} parent=1 // pred_fallthru
      _
    %1996 = vsyncpa [#allocation3], 1
    %1997 = vsyncpa [#allocation6], 1
    %1998 = vsyncpa [#allocation9], 1
    %1999 = vsyncpa [#allocation4], 1

</llo_original>
